<compile_context>
chip_gen: v6e
topology: v6e:2x2x1
jax: 0.10.0
libtpu: 0.0.40
codegen_flags: <defaults>
</compile_context>

<pallas_src>
import functools

import jax
import jax.numpy as jnp
from jax.experimental import pallas as pl
from jax.experimental.pallas import tpu as pltpu


def _pc_rnn_hc_a_kernel(tau_h, alpha_x, alpha_h, tt, o_dim,
                        # inputs
                        x_ref, c0_ref, h0_ref,
                        w_r_t_ref, w_c_t_ref, w_o_t_ref, w_o_ref, w_c_ref,
                        b_o_ref, b_r_ref,
                        # outputs
                        err_ref,
                        # scratch (persistent recurrent state for this batch block)
                        h_s, c_s):
    t_step = pl.program_id(1)

    # (Re)initialize recurrent state at the first time-chunk of each batch block.
    @pl.when(t_step == 0)
    def _():
        h_s[...] = h0_ref[...]
        c_s[...] = c0_ref[...]

    # Hoist constant loads out of the unrolled time loop (bf16 weights).
    w_r_t = w_r_t_ref[...]                 # (S, S)  = w_r.T
    w_c_t = w_c_t_ref[...]                 # (C, S)  = w_c.T
    w_o_t = w_o_t_ref[...]                 # (S, O)  = w_o.T
    w_o = w_o_ref[...]                     # (O, S)
    w_c = w_c_ref[...]                     # (S, C)
    b_r = b_r_ref[...]                     # (1, S) f32, implicit broadcast on add
    b_o = b_o_ref[...]                     # (1, O) f32

    keep = 1.0 - 1.0 / tau_h               # compile-time Python constants
    inv_tau = 1.0 / tau_h
    bf16 = jnp.bfloat16

    old_h = h_s[...]                       # (BB, S) f32
    c = c_s[...]                           # (BB, C) f32

    # Fully unrolled static loop -> static lane slices into the packed chunk.
    for i in range(tt):
        lo = i * o_dim
        hi = lo + o_dim
        drive = (jnp.dot(jnp.tanh(old_h).astype(bf16), w_r_t,
                         preferred_element_type=jnp.float32)
                 + jnp.dot(c.astype(bf16), w_c_t,
                           preferred_element_type=jnp.float32))        # (BB, S)
        h_prior = keep * old_h + inv_tau * (drive + b_r)
        tanh_h = jnp.tanh(h_prior)
        x_pred = jnp.dot(tanh_h.astype(bf16), w_o_t,
                         preferred_element_type=jnp.float32) + b_o     # (BB, O)
        error = x_pred - x_ref[:, lo:hi]                               # (BB, O)
        err_ref[:, lo:hi] = error

        if alpha_x > 0:   # compile-time constant, mirrors the Python `if` in torch
            grad = jnp.dot(error.astype(bf16), w_o,
                           preferred_element_type=jnp.float32)         # (BB, S)
            error_h = alpha_x * (1.0 - tanh_h * tanh_h) * grad         # = h_prior - h_post
            old_h = h_prior - error_h
            c = c - alpha_h * jnp.dot(error_h.astype(bf16), w_c,
                                      preferred_element_type=jnp.float32)
        else:
            old_h = h_prior

    h_s[...] = old_h
    c_s[...] = c


def pc_rnn_hc_a_forward(x, c_init, h_init, params,
                        tau_h, alpha_x, alpha_h,
                        *, time_chunk=32, batch_block=8):
    """Returns errors of shape (seq_len, batch, output_dim), f32."""
    T, B, O = x.shape
    S = params["w_r"].shape[0]
    C = params["w_c"].shape[1]
    f32, bf16 = jnp.float32, jnp.bfloat16

    # Batch blocks (sublane-aligned); blocks beyond B are independent garbage.
    BB = max(8, ((batch_block + 7) // 8) * 8)
    BP = pl.cdiv(B, BB) * BB
    NB = BP // BB

    # Time chunks (fully unrolled inside the kernel).
    TT = max(1, min(time_chunk, T))
    NT = pl.cdiv(T, TT)
    TP = NT * TT

    # Pad, then lane-dense pack: fold TT timesteps into the last (lane) dim.
    x_p = jnp.zeros((TP, BP, O), f32).at[:T, :B].set(x.astype(f32))
    x_packed = (x_p.reshape(NT, TT, BP, O)
                   .transpose(0, 2, 1, 3)
                   .reshape(NT, BP, TT * O))

    c0 = jnp.zeros((BP, C), f32).at[:B].set(c_init.astype(f32))
    h0 = jnp.zeros((BP, S), f32).at[:B].set(h_init.astype(f32))

    # bf16 weights (default-precision f32 MXU truncates to bf16 anyway);
    # accumulation stays f32 via preferred_element_type.
    w_o = params["w_o"].astype(bf16)                    # (O, S)
    w_o_t = params["w_o"].T.astype(bf16)                # (S, O)
    w_c = params["w_c"].astype(bf16)                    # (S, C)
    w_c_t = params["w_c"].T.astype(bf16)                # (C, S)
    w_r_t = params["w_r"].T.astype(bf16)                # (S, S)
    b_o = params["b_o"].astype(f32).reshape(1, O)
    b_r = params["b_r"].astype(f32).reshape(1, S)

    def full(shape):
        return pl.BlockSpec(shape, lambda b, s, _n=len(shape): (0,) * _n)

    kernel = functools.partial(_pc_rnn_hc_a_kernel,
                               tau_h, alpha_x, alpha_h, TT, O)

    errs_packed = pl.pallas_call(
        kernel,
        out_shape=jax.ShapeDtypeStruct((NT, BP, TT * O), f32),
        grid_spec=pltpu.PrefetchScalarGridSpec(
            num_scalar_prefetch=0,
            grid=(NB, NT),                                   # (batch blocks, time chunks)
            in_specs=[
                pl.BlockSpec((None, BB, TT * O), lambda b, s: (s, b, 0)),  # packed x chunk
                pl.BlockSpec((BB, C), lambda b, s: (b, 0)),                # c_init block
                pl.BlockSpec((BB, S), lambda b, s: (b, 0)),                # h_init block
                full((S, S)),                                              # w_r.T
                full((C, S)),                                              # w_c.T
                full((S, O)),                                              # w_o.T
                full((O, S)),                                              # w_o
                full((S, C)),                                              # w_c
                full((1, O)),                                              # b_o
                full((1, S)),                                              # b_r
            ],
            out_specs=pl.BlockSpec((None, BB, TT * O), lambda b, s: (s, b, 0)),
            scratch_shapes=[
                pltpu.VMEM((BB, S), f32),   # old_h_post
                pltpu.VMEM((BB, C), f32),   # c
            ],
        ),
        compiler_params=pltpu.CompilerParams(
            # batch blocks independent (megacore on v7x); time is sequential.
            dimension_semantics=("parallel", "arbitrary")),
    )(x_packed, c0, h0, w_r_t, w_c_t, w_o_t, w_o, w_c, b_o, b_r)

    # Unpack: (NT, BP, TT*O) -> (TP, BP, O), then drop padding.
    errs = (errs_packed.reshape(NT, BP, TT, O)
                       .transpose(0, 2, 1, 3)
                       .reshape(TP, BP, O))
    return errs[:T, :B, :]


def pc_rnn_hc_a_reference(x, c_init, h_init, params, tau_h, alpha_x, alpha_h):
    """Pure-JAX f32 reference mirroring the PyTorch loop, for verification."""
    T, B, O = x.shape
    w_o, b_o = params["w_o"], params["b_o"]
    w_c, w_r, b_r = params["w_c"], params["w_r"], params["b_r"]
    old_h = h_init
    c = c_init
    errs = []
    for t in range(T):
        h_prior = ((1.0 - 1.0 / tau_h) * old_h
                   + (1.0 / tau_h) * (jnp.tanh(old_h) @ w_r.T
                                      + c @ w_c.T + b_r[None, :]))
        x_pred = jnp.tanh(h_prior) @ w_o.T + b_o[None, :]
        error = x_pred - x[t]
        errs.append(error)
        if alpha_x > 0:
            h_post = h_prior - alpha_x * (1.0 - jnp.tanh(h_prior) ** 2) * (error @ w_o)
            error_h = h_prior - h_post
            c = c - alpha_h * (error_h @ w_c)
            old_h = h_post
        else:
            old_h = h_prior
    return jnp.stack(errs, axis=0)


if __name__ == "__main__":
    # Small, deterministic setup matching the module's shapes.
    seq_len, batch = 8, 2
    output_dim, states_dim, causes_dim = 16, 32, 8
    tau_h, alpha_x, alpha_h = 2.0, 0.1, 0.1

    key = jax.random.PRNGKey(0)
    ks = jax.random.split(key, 7)

    params = {
        "w_o": jax.random.normal(ks[0], (output_dim, states_dim),
                                 jnp.float32) / states_dim,
        "b_o": jax.random.normal(ks[1], (output_dim,), jnp.float32) / 10.0,
        "w_c": jax.random.normal(ks[2], (states_dim, causes_dim),
                                 jnp.float32) / causes_dim,
        "w_r": jax.random.normal(ks[3], (states_dim, states_dim),
                                 jnp.float32) / states_dim,
        "b_r": jax.random.normal(ks[4], (states_dim,), jnp.float32) / 10.0,
    }

    x = jax.random.normal(ks[5], (seq_len, batch, output_dim), jnp.float32)
    c_init = jax.random.normal(ks[6], (batch, causes_dim), jnp.float32)
    h_init = jnp.zeros((batch, states_dim), jnp.float32)  # torch default h_init=0

    errors = pc_rnn_hc_a_forward(x, c_init, h_init, params,
                                 tau_h, alpha_x, alpha_h, time_chunk=32)
    errors = jax.block_until_ready(errors)

    ref = pc_rnn_hc_a_reference(x, c_init, h_init, params,
                                tau_h, alpha_x, alpha_h)
    assert errors.shape == (seq_len, batch, output_dim)
    max_diff = float(jnp.max(jnp.abs(errors - ref)))
    # Tolerance covers bf16 MXU operands (identical to what default-precision
    # f32 dots already did) vs. the pure-f32 reference.
    assert max_diff < 2e-3, \
        f"Pallas kernel disagrees with reference (max|diff|={max_diff:.3e})"

    print("KERNEL_OK")
</pallas_src>

<mosaic_0001>
module attributes {stable_mosaic.version = 11 : i64} {
  func.func @_pc_rnn_hc_a_kernel(%arg0: i32, %arg1: i32, %arg2: memref<1x8x128xf32, #tpu.memory_space<vmem>>, %arg3: memref<8x8xf32, #tpu.memory_space<vmem>>, %arg4: memref<8x32xf32, #tpu.memory_space<vmem>>, %arg5: memref<32x32xbf16, #tpu.memory_space<vmem>>, %arg6: memref<8x32xbf16, #tpu.memory_space<vmem>>, %arg7: memref<32x16xbf16, #tpu.memory_space<vmem>>, %arg8: memref<16x32xbf16, #tpu.memory_space<vmem>>, %arg9: memref<32x8xbf16, #tpu.memory_space<vmem>>, %arg10: memref<1x16xf32, #tpu.memory_space<vmem>>, %arg11: memref<1x32xf32, #tpu.memory_space<vmem>>, %arg12: memref<1x8x128xf32, #tpu.memory_space<vmem>>, %arg13: memref<8x32xf32, #tpu.memory_space<vmem>>, %arg14: memref<8x8xf32, #tpu.memory_space<vmem>>) attributes {dimension_semantics = [#tpu.dimension_semantics<parallel>, #tpu.dimension_semantics<arbitrary>], iteration_bounds = array<i64: 1, 1>, scalar_prefetch = 0 : i64, scratch_operands = 2 : i64, tpu.core_type = #tpu.core_type<tc>, window_params = [{transform_indices = @transform_0, window_bounds = array<i64: 1, 8, 128>}, {transform_indices = @transform_1, window_bounds = array<i64: 8, 8>}, {transform_indices = @transform_2, window_bounds = array<i64: 8, 32>}, {pipeline_mode = #tpu.pipeline_mode<synchronous>, transform_indices = @transform_3, window_bounds = array<i64: 32, 32>}, {pipeline_mode = #tpu.pipeline_mode<synchronous>, transform_indices = @transform_4, window_bounds = array<i64: 8, 32>}, {pipeline_mode = #tpu.pipeline_mode<synchronous>, transform_indices = @transform_5, window_bounds = array<i64: 32, 16>}, {pipeline_mode = #tpu.pipeline_mode<synchronous>, transform_indices = @transform_6, window_bounds = array<i64: 16, 32>}, {pipeline_mode = #tpu.pipeline_mode<synchronous>, transform_indices = @transform_7, window_bounds = array<i64: 32, 8>}, {pipeline_mode = #tpu.pipeline_mode<synchronous>, transform_indices = @transform_8, window_bounds = array<i64: 1, 16>}, {pipeline_mode = #tpu.pipeline_mode<synchronous>, transform_indices = @transform_9, window_bounds = array<i64: 1, 32>}, {transform_indices = @transform_10, window_bounds = array<i64: 1, 8, 128>}]} {
    %c0_i32 = arith.constant 0 : i32
    %0 = arith.cmpi eq, %arg1, %c0_i32 : i32
    %1 = arith.extui %0 : i1 to i32
    %c0_i32_0 = arith.constant 0 : i32
    %2 = arith.cmpi ne, %1, %c0_i32_0 : i32
    scf.if %2 {
      %c0_142 = arith.constant 0 : index
      %c0_143 = arith.constant 0 : index
      %318 = vector.load %arg4[%c0_142, %c0_143] : memref<8x32xf32, #tpu.memory_space<vmem>>, vector<8x32xf32>
      %c0_144 = arith.constant 0 : index
      %c0_145 = arith.constant 0 : index
      %319 = vector.load %arg13[%c0_144, %c0_145] : memref<8x32xf32, #tpu.memory_space<vmem>>, vector<8x32xf32>
      tpu.vector_store %arg13[%c0_144, %c0_145], %318 {strides = array<i32>} : memref<8x32xf32, #tpu.memory_space<vmem>>, vector<8x32xf32>,
      %c0_146 = arith.constant 0 : index
      %c0_147 = arith.constant 0 : index
      %320 = vector.load %arg3[%c0_146, %c0_147] : memref<8x8xf32, #tpu.memory_space<vmem>>, vector<8x8xf32>
      %c0_148 = arith.constant 0 : index
      %c0_149 = arith.constant 0 : index
      %321 = vector.load %arg14[%c0_148, %c0_149] : memref<8x8xf32, #tpu.memory_space<vmem>>, vector<8x8xf32>
      tpu.vector_store %arg14[%c0_148, %c0_149], %320 {strides = array<i32>} : memref<8x8xf32, #tpu.memory_space<vmem>>, vector<8x8xf32>,
    } else {
    }
    %c0 = arith.constant 0 : index
    %c0_1 = arith.constant 0 : index
    %3 = vector.load %arg5[%c0, %c0_1] : memref<32x32xbf16, #tpu.memory_space<vmem>>, vector<32x32xbf16>
    %c0_2 = arith.constant 0 : index
    %c0_3 = arith.constant 0 : index
    %4 = vector.load %arg6[%c0_2, %c0_3] : memref<8x32xbf16, #tpu.memory_space<vmem>>, vector<8x32xbf16>
    %c0_4 = arith.constant 0 : index
    %c0_5 = arith.constant 0 : index
    %5 = vector.load %arg7[%c0_4, %c0_5] : memref<32x16xbf16, #tpu.memory_space<vmem>>, vector<32x16xbf16>
    %c0_6 = arith.constant 0 : index
    %c0_7 = arith.constant 0 : index
    %6 = vector.load %arg8[%c0_6, %c0_7] : memref<16x32xbf16, #tpu.memory_space<vmem>>, vector<16x32xbf16>
    %c0_8 = arith.constant 0 : index
    %c0_9 = arith.constant 0 : index
    %7 = vector.load %arg9[%c0_8, %c0_9] : memref<32x8xbf16, #tpu.memory_space<vmem>>, vector<32x8xbf16>
    %c0_10 = arith.constant 0 : index
    %c0_11 = arith.constant 0 : index
    %8 = vector.load %arg11[%c0_10, %c0_11] : memref<1x32xf32, #tpu.memory_space<vmem>>, vector<1x32xf32>
    %c0_12 = arith.constant 0 : index
    %c0_13 = arith.constant 0 : index
    %9 = vector.load %arg10[%c0_12, %c0_13] : memref<1x16xf32, #tpu.memory_space<vmem>>, vector<1x16xf32>
    %c0_14 = arith.constant 0 : index
    %c0_15 = arith.constant 0 : index
    %10 = vector.load %arg13[%c0_14, %c0_15] : memref<8x32xf32, #tpu.memory_space<vmem>>, vector<8x32xf32>
    %c0_16 = arith.constant 0 : index
    %c0_17 = arith.constant 0 : index
    %11 = vector.load %arg14[%c0_16, %c0_17] : memref<8x8xf32, #tpu.memory_space<vmem>>, vector<8x8xf32>
    %12 = math.tanh %10 : vector<8x32xf32>
    %13 = arith.truncf %12 : vector<8x32xf32> to vector<8x32xbf16>
    %cst = arith.constant dense<0.000000e+00> : vector<8x32xf32>
    %14 = tpu.matmul %13, %3, %cst {dimension_numbers = #tpu.dot_dimension_numbers<[1], [0], [0], [1], [0, 0, 1, 1], [], []>} : vector<8x32xbf16>, vector<32x32xbf16>, vector<8x32xf32> -> vector<8x32xf32>
    %15 = arith.truncf %11 : vector<8x8xf32> to vector<8x8xbf16>
    %cst_18 = arith.constant dense<0.000000e+00> : vector<8x32xf32>
    %16 = tpu.matmul %15, %4, %cst_18 {dimension_numbers = #tpu.dot_dimension_numbers<[1], [0], [0], [1], [0, 0, 1, 1], [], []>} : vector<8x8xbf16>, vector<8x32xbf16>, vector<8x32xf32> -> vector<8x32xf32>
    %17 = arith.addf %14, %16 : vector<8x32xf32>
    %cst_19 = arith.constant 5.000000e-01 : f32
    %18 = vector.broadcast %cst_19 : f32 to vector<8x32xf32>
    %19 = arith.mulf %18, %10 : vector<8x32xf32>
    %20 = vector.broadcast %8 : vector<1x32xf32> to vector<8x32xf32>
    %21 = arith.addf %17, %20 : vector<8x32xf32>
    %cst_20 = arith.constant 5.000000e-01 : f32
    %22 = vector.broadcast %cst_20 : f32 to vector<8x32xf32>
    %23 = arith.mulf %22, %21 : vector<8x32xf32>
    %24 = arith.addf %19, %23 : vector<8x32xf32>
    %25 = math.tanh %24 : vector<8x32xf32>
    %26 = arith.truncf %25 : vector<8x32xf32> to vector<8x32xbf16>
    %cst_21 = arith.constant dense<0.000000e+00> : vector<8x16xf32>
    %27 = tpu.matmul %26, %5, %cst_21 {dimension_numbers = #tpu.dot_dimension_numbers<[1], [0], [0], [1], [0, 0, 1, 1], [], []>} : vector<8x32xbf16>, vector<32x16xbf16>, vector<8x16xf32> -> vector<8x16xf32>
    %28 = vector.broadcast %9 : vector<1x16xf32> to vector<8x16xf32>
    %29 = arith.addf %27, %28 : vector<8x16xf32>
    %c0_22 = arith.constant 0 : index
    %c0_23 = arith.constant 0 : index
    %c0_24 = arith.constant 0 : index
    %30 = vector.load %arg2[%c0_22, %c0_23, %c0_24] : memref<1x8x128xf32, #tpu.memory_space<vmem>>, vector<1x8x16xf32>
    %31 = vector.shape_cast %30 : vector<1x8x16xf32> to vector<8x16xf32>
    %32 = arith.subf %29, %31 : vector<8x16xf32>
    %c0_25 = arith.constant 0 : index
    %c0_26 = arith.constant 0 : index
    %c0_27 = arith.constant 0 : index
    %33 = vector.load %arg12[%c0_25, %c0_26, %c0_27] : memref<1x8x128xf32, #tpu.memory_space<vmem>>, vector<1x8x16xf32>
    %34 = vector.shape_cast %33 : vector<1x8x16xf32> to vector<8x16xf32>
    %35 = vector.shape_cast %32 : vector<8x16xf32> to vector<1x8x16xf32>
    tpu.vector_store %arg12[%c0_25, %c0_26, %c0_27], %35 {strides = array<i32>} : memref<1x8x128xf32, #tpu.memory_space<vmem>>, vector<1x8x16xf32>,
    %36 = arith.truncf %32 : vector<8x16xf32> to vector<8x16xbf16>
    %cst_28 = arith.constant dense<0.000000e+00> : vector<8x32xf32>
    %37 = tpu.matmul %36, %6, %cst_28 {dimension_numbers = #tpu.dot_dimension_numbers<[1], [0], [0], [1], [0, 0, 1, 1], [], []>} : vector<8x16xbf16>, vector<16x32xbf16>, vector<8x32xf32> -> vector<8x32xf32>
    %38 = arith.mulf %25, %25 : vector<8x32xf32>
    %cst_29 = arith.constant 1.000000e+00 : f32
    %39 = vector.broadcast %cst_29 : f32 to vector<8x32xf32>
    %40 = arith.subf %39, %38 : vector<8x32xf32>
    %cst_30 = arith.constant 1.000000e-01 : f32
    %41 = vector.broadcast %cst_30 : f32 to vector<8x32xf32>
    %42 = arith.mulf %41, %40 : vector<8x32xf32>
    %43 = arith.mulf %42, %37 : vector<8x32xf32>
    %44 = arith.subf %24, %43 : vector<8x32xf32>
    %45 = arith.truncf %43 : vector<8x32xf32> to vector<8x32xbf16>
    %cst_31 = arith.constant dense<0.000000e+00> : vector<8x8xf32>
    %46 = tpu.matmul %45, %7, %cst_31 {dimension_numbers = #tpu.dot_dimension_numbers<[1], [0], [0], [1], [0, 0, 1, 1], [], []>} : vector<8x32xbf16>, vector<32x8xbf16>, vector<8x8xf32> -> vector<8x8xf32>
    %cst_32 = arith.constant 1.000000e-01 : f32
    %47 = vector.broadcast %cst_32 : f32 to vector<8x8xf32>
    %48 = arith.mulf %47, %46 : vector<8x8xf32>
    %49 = arith.subf %11, %48 : vector<8x8xf32>
    %50 = math.tanh %44 : vector<8x32xf32>
    %51 = arith.truncf %50 : vector<8x32xf32> to vector<8x32xbf16>
    %cst_33 = arith.constant dense<0.000000e+00> : vector<8x32xf32>
    %52 = tpu.matmul %51, %3, %cst_33 {dimension_numbers = #tpu.dot_dimension_numbers<[1], [0], [0], [1], [0, 0, 1, 1], [], []>} : vector<8x32xbf16>, vector<32x32xbf16>, vector<8x32xf32> -> vector<8x32xf32>
    %53 = arith.truncf %49 : vector<8x8xf32> to vector<8x8xbf16>
    %cst_34 = arith.constant dense<0.000000e+00> : vector<8x32xf32>
    %54 = tpu.matmul %53, %4, %cst_34 {dimension_numbers = #tpu.dot_dimension_numbers<[1], [0], [0], [1], [0, 0, 1, 1], [], []>} : vector<8x8xbf16>, vector<8x32xbf16>, vector<8x32xf32> -> vector<8x32xf32>
    %55 = arith.addf %52, %54 : vector<8x32xf32>
    %cst_35 = arith.constant 5.000000e-01 : f32
    %56 = vector.broadcast %cst_35 : f32 to vector<8x32xf32>
    %57 = arith.mulf %56, %44 : vector<8x32xf32>
    %58 = vector.broadcast %8 : vector<1x32xf32> to vector<8x32xf32>
    %59 = arith.addf %55, %58 : vector<8x32xf32>
    %cst_36 = arith.constant 5.000000e-01 : f32
    %60 = vector.broadcast %cst_36 : f32 to vector<8x32xf32>
    %61 = arith.mulf %60, %59 : vector<8x32xf32>
    %62 = arith.addf %57, %61 : vector<8x32xf32>
    %63 = math.tanh %62 : vector<8x32xf32>
    %64 = arith.truncf %63 : vector<8x32xf32> to vector<8x32xbf16>
    %cst_37 = arith.constant dense<0.000000e+00> : vector<8x16xf32>
    %65 = tpu.matmul %64, %5, %cst_37 {dimension_numbers = #tpu.dot_dimension_numbers<[1], [0], [0], [1], [0, 0, 1, 1], [], []>} : vector<8x32xbf16>, vector<32x16xbf16>, vector<8x16xf32> -> vector<8x16xf32>
    %66 = vector.broadcast %9 : vector<1x16xf32> to vector<8x16xf32>
    %67 = arith.addf %65, %66 : vector<8x16xf32>
    %c0_38 = arith.constant 0 : index
    %c0_39 = arith.constant 0 : index
    %c16 = arith.constant 16 : index
    %68 = vector.load %arg2[%c0_38, %c0_39, %c16] : memref<1x8x128xf32, #tpu.memory_space<vmem>>, vector<1x8x16xf32>
    %69 = vector.shape_cast %68 : vector<1x8x16xf32> to vector<8x16xf32>
    %70 = arith.subf %67, %69 : vector<8x16xf32>
    %c0_40 = arith.constant 0 : index
    %c0_41 = arith.constant 0 : index
    %c16_42 = arith.constant 16 : index
    %71 = vector.load %arg12[%c0_40, %c0_41, %c16_42] : memref<1x8x128xf32, #tpu.memory_space<vmem>>, vector<1x8x16xf32>
    %72 = vector.shape_cast %71 : vector<1x8x16xf32> to vector<8x16xf32>
    %73 = vector.shape_cast %70 : vector<8x16xf32> to vector<1x8x16xf32>
    tpu.vector_store %arg12[%c0_40, %c0_41, %c16_42], %73 {strides = array<i32>} : memref<1x8x128xf32, #tpu.memory_space<vmem>>, vector<1x8x16xf32>,
    %74 = arith.truncf %70 : vector<8x16xf32> to vector<8x16xbf16>
    %cst_43 = arith.constant dense<0.000000e+00> : vector<8x32xf32>
    %75 = tpu.matmul %74, %6, %cst_43 {dimension_numbers = #tpu.dot_dimension_numbers<[1], [0], [0], [1], [0, 0, 1, 1], [], []>} : vector<8x16xbf16>, vector<16x32xbf16>, vector<8x32xf32> -> vector<8x32xf32>
    %76 = arith.mulf %63, %63 : vector<8x32xf32>
    %cst_44 = arith.constant 1.000000e+00 : f32
    %77 = vector.broadcast %cst_44 : f32 to vector<8x32xf32>
    %78 = arith.subf %77, %76 : vector<8x32xf32>
    %cst_45 = arith.constant 1.000000e-01 : f32
    %79 = vector.broadcast %cst_45 : f32 to vector<8x32xf32>
    %80 = arith.mulf %79, %78 : vector<8x32xf32>
    %81 = arith.mulf %80, %75 : vector<8x32xf32>
    %82 = arith.subf %62, %81 : vector<8x32xf32>
    %83 = arith.truncf %81 : vector<8x32xf32> to vector<8x32xbf16>
    %cst_46 = arith.constant dense<0.000000e+00> : vector<8x8xf32>
    %84 = tpu.matmul %83, %7, %cst_46 {dimension_numbers = #tpu.dot_dimension_numbers<[1], [0], [0], [1], [0, 0, 1, 1], [], []>} : vector<8x32xbf16>, vector<32x8xbf16>, vector<8x8xf32> -> vector<8x8xf32>
    %cst_47 = arith.constant 1.000000e-01 : f32
    %85 = vector.broadcast %cst_47 : f32 to vector<8x8xf32>
    %86 = arith.mulf %85, %84 : vector<8x8xf32>
    %87 = arith.subf %49, %86 : vector<8x8xf32>
    %88 = math.tanh %82 : vector<8x32xf32>
    %89 = arith.truncf %88 : vector<8x32xf32> to vector<8x32xbf16>
    %cst_48 = arith.constant dense<0.000000e+00> : vector<8x32xf32>
    %90 = tpu.matmul %89, %3, %cst_48 {dimension_numbers = #tpu.dot_dimension_numbers<[1], [0], [0], [1], [0, 0, 1, 1], [], []>} : vector<8x32xbf16>, vector<32x32xbf16>, vector<8x32xf32> -> vector<8x32xf32>
    %91 = arith.truncf %87 : vector<8x8xf32> to vector<8x8xbf16>
    %cst_49 = arith.constant dense<0.000000e+00> : vector<8x32xf32>
    %92 = tpu.matmul %91, %4, %cst_49 {dimension_numbers = #tpu.dot_dimension_numbers<[1], [0], [0], [1], [0, 0, 1, 1], [], []>} : vector<8x8xbf16>, vector<8x32xbf16>, vector<8x32xf32> -> vector<8x32xf32>
    %93 = arith.addf %90, %92 : vector<8x32xf32>
    %cst_50 = arith.constant 5.000000e-01 : f32
    %94 = vector.broadcast %cst_50 : f32 to vector<8x32xf32>
    %95 = arith.mulf %94, %82 : vector<8x32xf32>
    %96 = vector.broadcast %8 : vector<1x32xf32> to vector<8x32xf32>
    %97 = arith.addf %93, %96 : vector<8x32xf32>
    %cst_51 = arith.constant 5.000000e-01 : f32
    %98 = vector.broadcast %cst_51 : f32 to vector<8x32xf32>
    %99 = arith.mulf %98, %97 : vector<8x32xf32>
    %100 = arith.addf %95, %99 : vector<8x32xf32>
    %101 = math.tanh %100 : vector<8x32xf32>
    %102 = arith.truncf %101 : vector<8x32xf32> to vector<8x32xbf16>
    %cst_52 = arith.constant dense<0.000000e+00> : vector<8x16xf32>
    %103 = tpu.matmul %102, %5, %cst_52 {dimension_numbers = #tpu.dot_dimension_numbers<[1], [0], [0], [1], [0, 0, 1, 1], [], []>} : vector<8x32xbf16>, vector<32x16xbf16>, vector<8x16xf32> -> vector<8x16xf32>
    %104 = vector.broadcast %9 : vector<1x16xf32> to vector<8x16xf32>
    %105 = arith.addf %103, %104 : vector<8x16xf32>
    %c0_53 = arith.constant 0 : index
    %c0_54 = arith.constant 0 : index
    %c32 = arith.constant 32 : index
    %106 = vector.load %arg2[%c0_53, %c0_54, %c32] : memref<1x8x128xf32, #tpu.memory_space<vmem>>, vector<1x8x16xf32>
    %107 = vector.shape_cast %106 : vector<1x8x16xf32> to vector<8x16xf32>
    %108 = arith.subf %105, %107 : vector<8x16xf32>
    %c0_55 = arith.constant 0 : index
    %c0_56 = arith.constant 0 : index
    %c32_57 = arith.constant 32 : index
    %109 = vector.load %arg12[%c0_55, %c0_56, %c32_57] : memref<1x8x128xf32, #tpu.memory_space<vmem>>, vector<1x8x16xf32>
    %110 = vector.shape_cast %109 : vector<1x8x16xf32> to vector<8x16xf32>
    %111 = vector.shape_cast %108 : vector<8x16xf32> to vector<1x8x16xf32>
    tpu.vector_store %arg12[%c0_55, %c0_56, %c32_57], %111 {strides = array<i32>} : memref<1x8x128xf32, #tpu.memory_space<vmem>>, vector<1x8x16xf32>,
    %112 = arith.truncf %108 : vector<8x16xf32> to vector<8x16xbf16>
    %cst_58 = arith.constant dense<0.000000e+00> : vector<8x32xf32>
    %113 = tpu.matmul %112, %6, %cst_58 {dimension_numbers = #tpu.dot_dimension_numbers<[1], [0], [0], [1], [0, 0, 1, 1], [], []>} : vector<8x16xbf16>, vector<16x32xbf16>, vector<8x32xf32> -> vector<8x32xf32>
    %114 = arith.mulf %101, %101 : vector<8x32xf32>
    %cst_59 = arith.constant 1.000000e+00 : f32
    %115 = vector.broadcast %cst_59 : f32 to vector<8x32xf32>
    %116 = arith.subf %115, %114 : vector<8x32xf32>
    %cst_60 = arith.constant 1.000000e-01 : f32
    %117 = vector.broadcast %cst_60 : f32 to vector<8x32xf32>
    %118 = arith.mulf %117, %116 : vector<8x32xf32>
    %119 = arith.mulf %118, %113 : vector<8x32xf32>
    %120 = arith.subf %100, %119 : vector<8x32xf32>
    %121 = arith.truncf %119 : vector<8x32xf32> to vector<8x32xbf16>
    %cst_61 = arith.constant dense<0.000000e+00> : vector<8x8xf32>
    %122 = tpu.matmul %121, %7, %cst_61 {dimension_numbers = #tpu.dot_dimension_numbers<[1], [0], [0], [1], [0, 0, 1, 1], [], []>} : vector<8x32xbf16>, vector<32x8xbf16>, vector<8x8xf32> -> vector<8x8xf32>
    %cst_62 = arith.constant 1.000000e-01 : f32
    %123 = vector.broadcast %cst_62 : f32 to vector<8x8xf32>
    %124 = arith.mulf %123, %122 : vector<8x8xf32>
    %125 = arith.subf %87, %124 : vector<8x8xf32>
    %126 = math.tanh %120 : vector<8x32xf32>
    %127 = arith.truncf %126 : vector<8x32xf32> to vector<8x32xbf16>
    %cst_63 = arith.constant dense<0.000000e+00> : vector<8x32xf32>
    %128 = tpu.matmul %127, %3, %cst_63 {dimension_numbers = #tpu.dot_dimension_numbers<[1], [0], [0], [1], [0, 0, 1, 1], [], []>} : vector<8x32xbf16>, vector<32x32xbf16>, vector<8x32xf32> -> vector<8x32xf32>
    %129 = arith.truncf %125 : vector<8x8xf32> to vector<8x8xbf16>
    %cst_64 = arith.constant dense<0.000000e+00> : vector<8x32xf32>
    %130 = tpu.matmul %129, %4, %cst_64 {dimension_numbers = #tpu.dot_dimension_numbers<[1], [0], [0], [1], [0, 0, 1, 1], [], []>} : vector<8x8xbf16>, vector<8x32xbf16>, vector<8x32xf32> -> vector<8x32xf32>
    %131 = arith.addf %128, %130 : vector<8x32xf32>
    %cst_65 = arith.constant 5.000000e-01 : f32
    %132 = vector.broadcast %cst_65 : f32 to vector<8x32xf32>
    %133 = arith.mulf %132, %120 : vector<8x32xf32>
    %134 = vector.broadcast %8 : vector<1x32xf32> to vector<8x32xf32>
    %135 = arith.addf %131, %134 : vector<8x32xf32>
    %cst_66 = arith.constant 5.000000e-01 : f32
    %136 = vector.broadcast %cst_66 : f32 to vector<8x32xf32>
    %137 = arith.mulf %136, %135 : vector<8x32xf32>
    %138 = arith.addf %133, %137 : vector<8x32xf32>
    %139 = math.tanh %138 : vector<8x32xf32>
    %140 = arith.truncf %139 : vector<8x32xf32> to vector<8x32xbf16>
    %cst_67 = arith.constant dense<0.000000e+00> : vector<8x16xf32>
    %141 = tpu.matmul %140, %5, %cst_67 {dimension_numbers = #tpu.dot_dimension_numbers<[1], [0], [0], [1], [0, 0, 1, 1], [], []>} : vector<8x32xbf16>, vector<32x16xbf16>, vector<8x16xf32> -> vector<8x16xf32>
    %142 = vector.broadcast %9 : vector<1x16xf32> to vector<8x16xf32>
    %143 = arith.addf %141, %142 : vector<8x16xf32>
    %c0_68 = arith.constant 0 : index
    %c0_69 = arith.constant 0 : index
    %c48 = arith.constant 48 : index
    %144 = vector.load %arg2[%c0_68, %c0_69, %c48] : memref<1x8x128xf32, #tpu.memory_space<vmem>>, vector<1x8x16xf32>
    %145 = vector.shape_cast %144 : vector<1x8x16xf32> to vector<8x16xf32>
    %146 = arith.subf %143, %145 : vector<8x16xf32>
    %c0_70 = arith.constant 0 : index
    %c0_71 = arith.constant 0 : index
    %c48_72 = arith.constant 48 : index
    %147 = vector.load %arg12[%c0_70, %c0_71, %c48_72] : memref<1x8x128xf32, #tpu.memory_space<vmem>>, vector<1x8x16xf32>
    %148 = vector.shape_cast %147 : vector<1x8x16xf32> to vector<8x16xf32>
    %149 = vector.shape_cast %146 : vector<8x16xf32> to vector<1x8x16xf32>
    tpu.vector_store %arg12[%c0_70, %c0_71, %c48_72], %149 {strides = array<i32>} : memref<1x8x128xf32, #tpu.memory_space<vmem>>, vector<1x8x16xf32>,
    %150 = arith.truncf %146 : vector<8x16xf32> to vector<8x16xbf16>
    %cst_73 = arith.constant dense<0.000000e+00> : vector<8x32xf32>
    %151 = tpu.matmul %150, %6, %cst_73 {dimension_numbers = #tpu.dot_dimension_numbers<[1], [0], [0], [1], [0, 0, 1, 1], [], []>} : vector<8x16xbf16>, vector<16x32xbf16>, vector<8x32xf32> -> vector<8x32xf32>
    %152 = arith.mulf %139, %139 : vector<8x32xf32>
    %cst_74 = arith.constant 1.000000e+00 : f32
    %153 = vector.broadcast %cst_74 : f32 to vector<8x32xf32>
    %154 = arith.subf %153, %152 : vector<8x32xf32>
    %cst_75 = arith.constant 1.000000e-01 : f32
    %155 = vector.broadcast %cst_75 : f32 to vector<8x32xf32>
    %156 = arith.mulf %155, %154 : vector<8x32xf32>
    %157 = arith.mulf %156, %151 : vector<8x32xf32>
    %158 = arith.subf %138, %157 : vector<8x32xf32>
    %159 = arith.truncf %157 : vector<8x32xf32> to vector<8x32xbf16>
    %cst_76 = arith.constant dense<0.000000e+00> : vector<8x8xf32>
    %160 = tpu.matmul %159, %7, %cst_76 {dimension_numbers = #tpu.dot_dimension_numbers<[1], [0], [0], [1], [0, 0, 1, 1], [], []>} : vector<8x32xbf16>, vector<32x8xbf16>, vector<8x8xf32> -> vector<8x8xf32>
    %cst_77 = arith.constant 1.000000e-01 : f32
    %161 = vector.broadcast %cst_77 : f32 to vector<8x8xf32>
    %162 = arith.mulf %161, %160 : vector<8x8xf32>
    %163 = arith.subf %125, %162 : vector<8x8xf32>
    %164 = math.tanh %158 : vector<8x32xf32>
    %165 = arith.truncf %164 : vector<8x32xf32> to vector<8x32xbf16>
    %cst_78 = arith.constant dense<0.000000e+00> : vector<8x32xf32>
    %166 = tpu.matmul %165, %3, %cst_78 {dimension_numbers = #tpu.dot_dimension_numbers<[1], [0], [0], [1], [0, 0, 1, 1], [], []>} : vector<8x32xbf16>, vector<32x32xbf16>, vector<8x32xf32> -> vector<8x32xf32>
    %167 = arith.truncf %163 : vector<8x8xf32> to vector<8x8xbf16>
    %cst_79 = arith.constant dense<0.000000e+00> : vector<8x32xf32>
    %168 = tpu.matmul %167, %4, %cst_79 {dimension_numbers = #tpu.dot_dimension_numbers<[1], [0], [0], [1], [0, 0, 1, 1], [], []>} : vector<8x8xbf16>, vector<8x32xbf16>, vector<8x32xf32> -> vector<8x32xf32>
    %169 = arith.addf %166, %168 : vector<8x32xf32>
    %cst_80 = arith.constant 5.000000e-01 : f32
    %170 = vector.broadcast %cst_80 : f32 to vector<8x32xf32>
    %171 = arith.mulf %170, %158 : vector<8x32xf32>
    %172 = vector.broadcast %8 : vector<1x32xf32> to vector<8x32xf32>
    %173 = arith.addf %169, %172 : vector<8x32xf32>
    %cst_81 = arith.constant 5.000000e-01 : f32
    %174 = vector.broadcast %cst_81 : f32 to vector<8x32xf32>
    %175 = arith.mulf %174, %173 : vector<8x32xf32>
    %176 = arith.addf %171, %175 : vector<8x32xf32>
    %177 = math.tanh %176 : vector<8x32xf32>
    %178 = arith.truncf %177 : vector<8x32xf32> to vector<8x32xbf16>
    %cst_82 = arith.constant dense<0.000000e+00> : vector<8x16xf32>
    %179 = tpu.matmul %178, %5, %cst_82 {dimension_numbers = #tpu.dot_dimension_numbers<[1], [0], [0], [1], [0, 0, 1, 1], [], []>} : vector<8x32xbf16>, vector<32x16xbf16>, vector<8x16xf32> -> vector<8x16xf32>
    %180 = vector.broadcast %9 : vector<1x16xf32> to vector<8x16xf32>
    %181 = arith.addf %179, %180 : vector<8x16xf32>
    %c0_83 = arith.constant 0 : index
    %c0_84 = arith.constant 0 : index
    %c64 = arith.constant 64 : index
    %182 = vector.load %arg2[%c0_83, %c0_84, %c64] : memref<1x8x128xf32, #tpu.memory_space<vmem>>, vector<1x8x16xf32>
    %183 = vector.shape_cast %182 : vector<1x8x16xf32> to vector<8x16xf32>
    %184 = arith.subf %181, %183 : vector<8x16xf32>
    %c0_85 = arith.constant 0 : index
    %c0_86 = arith.constant 0 : index
    %c64_87 = arith.constant 64 : index
    %185 = vector.load %arg12[%c0_85, %c0_86, %c64_87] : memref<1x8x128xf32, #tpu.memory_space<vmem>>, vector<1x8x16xf32>
    %186 = vector.shape_cast %185 : vector<1x8x16xf32> to vector<8x16xf32>
    %187 = vector.shape_cast %184 : vector<8x16xf32> to vector<1x8x16xf32>
    tpu.vector_store %arg12[%c0_85, %c0_86, %c64_87], %187 {strides = array<i32>} : memref<1x8x128xf32, #tpu.memory_space<vmem>>, vector<1x8x16xf32>,
    %188 = arith.truncf %184 : vector<8x16xf32> to vector<8x16xbf16>
    %cst_88 = arith.constant dense<0.000000e+00> : vector<8x32xf32>
    %189 = tpu.matmul %188, %6, %cst_88 {dimension_numbers = #tpu.dot_dimension_numbers<[1], [0], [0], [1], [0, 0, 1, 1], [], []>} : vector<8x16xbf16>, vector<16x32xbf16>, vector<8x32xf32> -> vector<8x32xf32>
    %190 = arith.mulf %177, %177 : vector<8x32xf32>
    %cst_89 = arith.constant 1.000000e+00 : f32
    %191 = vector.broadcast %cst_89 : f32 to vector<8x32xf32>
    %192 = arith.subf %191, %190 : vector<8x32xf32>
    %cst_90 = arith.constant 1.000000e-01 : f32
    %193 = vector.broadcast %cst_90 : f32 to vector<8x32xf32>
    %194 = arith.mulf %193, %192 : vector<8x32xf32>
    %195 = arith.mulf %194, %189 : vector<8x32xf32>
    %196 = arith.subf %176, %195 : vector<8x32xf32>
    %197 = arith.truncf %195 : vector<8x32xf32> to vector<8x32xbf16>
    %cst_91 = arith.constant dense<0.000000e+00> : vector<8x8xf32>
    %198 = tpu.matmul %197, %7, %cst_91 {dimension_numbers = #tpu.dot_dimension_numbers<[1], [0], [0], [1], [0, 0, 1, 1], [], []>} : vector<8x32xbf16>, vector<32x8xbf16>, vector<8x8xf32> -> vector<8x8xf32>
    %cst_92 = arith.constant 1.000000e-01 : f32
    %199 = vector.broadcast %cst_92 : f32 to vector<8x8xf32>
    %200 = arith.mulf %199, %198 : vector<8x8xf32>
    %201 = arith.subf %163, %200 : vector<8x8xf32>
    %202 = math.tanh %196 : vector<8x32xf32>
    %203 = arith.truncf %202 : vector<8x32xf32> to vector<8x32xbf16>
    %cst_93 = arith.constant dense<0.000000e+00> : vector<8x32xf32>
    %204 = tpu.matmul %203, %3, %cst_93 {dimension_numbers = #tpu.dot_dimension_numbers<[1], [0], [0], [1], [0, 0, 1, 1], [], []>} : vector<8x32xbf16>, vector<32x32xbf16>, vector<8x32xf32> -> vector<8x32xf32>
    %205 = arith.truncf %201 : vector<8x8xf32> to vector<8x8xbf16>
    %cst_94 = arith.constant dense<0.000000e+00> : vector<8x32xf32>
    %206 = tpu.matmul %205, %4, %cst_94 {dimension_numbers = #tpu.dot_dimension_numbers<[1], [0], [0], [1], [0, 0, 1, 1], [], []>} : vector<8x8xbf16>, vector<8x32xbf16>, vector<8x32xf32> -> vector<8x32xf32>
    %207 = arith.addf %204, %206 : vector<8x32xf32>
    %cst_95 = arith.constant 5.000000e-01 : f32
    %208 = vector.broadcast %cst_95 : f32 to vector<8x32xf32>
    %209 = arith.mulf %208, %196 : vector<8x32xf32>
    %210 = vector.broadcast %8 : vector<1x32xf32> to vector<8x32xf32>
    %211 = arith.addf %207, %210 : vector<8x32xf32>
    %cst_96 = arith.constant 5.000000e-01 : f32
    %212 = vector.broadcast %cst_96 : f32 to vector<8x32xf32>
    %213 = arith.mulf %212, %211 : vector<8x32xf32>
    %214 = arith.addf %209, %213 : vector<8x32xf32>
    %215 = math.tanh %214 : vector<8x32xf32>
    %216 = arith.truncf %215 : vector<8x32xf32> to vector<8x32xbf16>
    %cst_97 = arith.constant dense<0.000000e+00> : vector<8x16xf32>
    %217 = tpu.matmul %216, %5, %cst_97 {dimension_numbers = #tpu.dot_dimension_numbers<[1], [0], [0], [1], [0, 0, 1, 1], [], []>} : vector<8x32xbf16>, vector<32x16xbf16>, vector<8x16xf32> -> vector<8x16xf32>
    %218 = vector.broadcast %9 : vector<1x16xf32> to vector<8x16xf32>
    %219 = arith.addf %217, %218 : vector<8x16xf32>
    %c0_98 = arith.constant 0 : index
    %c0_99 = arith.constant 0 : index
    %c80 = arith.constant 80 : index
    %220 = vector.load %arg2[%c0_98, %c0_99, %c80] : memref<1x8x128xf32, #tpu.memory_space<vmem>>, vector<1x8x16xf32>
    %221 = vector.shape_cast %220 : vector<1x8x16xf32> to vector<8x16xf32>
    %222 = arith.subf %219, %221 : vector<8x16xf32>
    %c0_100 = arith.constant 0 : index
    %c0_101 = arith.constant 0 : index
    %c80_102 = arith.constant 80 : index
    %223 = vector.load %arg12[%c0_100, %c0_101, %c80_102] : memref<1x8x128xf32, #tpu.memory_space<vmem>>, vector<1x8x16xf32>
    %224 = vector.shape_cast %223 : vector<1x8x16xf32> to vector<8x16xf32>
    %225 = vector.shape_cast %222 : vector<8x16xf32> to vector<1x8x16xf32>
    tpu.vector_store %arg12[%c0_100, %c0_101, %c80_102], %225 {strides = array<i32>} : memref<1x8x128xf32, #tpu.memory_space<vmem>>, vector<1x8x16xf32>,
    %226 = arith.truncf %222 : vector<8x16xf32> to vector<8x16xbf16>
    %cst_103 = arith.constant dense<0.000000e+00> : vector<8x32xf32>
    %227 = tpu.matmul %226, %6, %cst_103 {dimension_numbers = #tpu.dot_dimension_numbers<[1], [0], [0], [1], [0, 0, 1, 1], [], []>} : vector<8x16xbf16>, vector<16x32xbf16>, vector<8x32xf32> -> vector<8x32xf32>
    %228 = arith.mulf %215, %215 : vector<8x32xf32>
    %cst_104 = arith.constant 1.000000e+00 : f32
    %229 = vector.broadcast %cst_104 : f32 to vector<8x32xf32>
    %230 = arith.subf %229, %228 : vector<8x32xf32>
    %cst_105 = arith.constant 1.000000e-01 : f32
    %231 = vector.broadcast %cst_105 : f32 to vector<8x32xf32>
    %232 = arith.mulf %231, %230 : vector<8x32xf32>
    %233 = arith.mulf %232, %227 : vector<8x32xf32>
    %234 = arith.subf %214, %233 : vector<8x32xf32>
    %235 = arith.truncf %233 : vector<8x32xf32> to vector<8x32xbf16>
    %cst_106 = arith.constant dense<0.000000e+00> : vector<8x8xf32>
    %236 = tpu.matmul %235, %7, %cst_106 {dimension_numbers = #tpu.dot_dimension_numbers<[1], [0], [0], [1], [0, 0, 1, 1], [], []>} : vector<8x32xbf16>, vector<32x8xbf16>, vector<8x8xf32> -> vector<8x8xf32>
    %cst_107 = arith.constant 1.000000e-01 : f32
    %237 = vector.broadcast %cst_107 : f32 to vector<8x8xf32>
    %238 = arith.mulf %237, %236 : vector<8x8xf32>
    %239 = arith.subf %201, %238 : vector<8x8xf32>
    %240 = math.tanh %234 : vector<8x32xf32>
    %241 = arith.truncf %240 : vector<8x32xf32> to vector<8x32xbf16>
    %cst_108 = arith.constant dense<0.000000e+00> : vector<8x32xf32>
    %242 = tpu.matmul %241, %3, %cst_108 {dimension_numbers = #tpu.dot_dimension_numbers<[1], [0], [0], [1], [0, 0, 1, 1], [], []>} : vector<8x32xbf16>, vector<32x32xbf16>, vector<8x32xf32> -> vector<8x32xf32>
    %243 = arith.truncf %239 : vector<8x8xf32> to vector<8x8xbf16>
    %cst_109 = arith.constant dense<0.000000e+00> : vector<8x32xf32>
    %244 = tpu.matmul %243, %4, %cst_109 {dimension_numbers = #tpu.dot_dimension_numbers<[1], [0], [0], [1], [0, 0, 1, 1], [], []>} : vector<8x8xbf16>, vector<8x32xbf16>, vector<8x32xf32> -> vector<8x32xf32>
    %245 = arith.addf %242, %244 : vector<8x32xf32>
    %cst_110 = arith.constant 5.000000e-01 : f32
    %246 = vector.broadcast %cst_110 : f32 to vector<8x32xf32>
    %247 = arith.mulf %246, %234 : vector<8x32xf32>
    %248 = vector.broadcast %8 : vector<1x32xf32> to vector<8x32xf32>
    %249 = arith.addf %245, %248 : vector<8x32xf32>
    %cst_111 = arith.constant 5.000000e-01 : f32
    %250 = vector.broadcast %cst_111 : f32 to vector<8x32xf32>
    %251 = arith.mulf %250, %249 : vector<8x32xf32>
    %252 = arith.addf %247, %251 : vector<8x32xf32>
    %253 = math.tanh %252 : vector<8x32xf32>
    %254 = arith.truncf %253 : vector<8x32xf32> to vector<8x32xbf16>
    %cst_112 = arith.constant dense<0.000000e+00> : vector<8x16xf32>
    %255 = tpu.matmul %254, %5, %cst_112 {dimension_numbers = #tpu.dot_dimension_numbers<[1], [0], [0], [1], [0, 0, 1, 1], [], []>} : vector<8x32xbf16>, vector<32x16xbf16>, vector<8x16xf32> -> vector<8x16xf32>
    %256 = vector.broadcast %9 : vector<1x16xf32> to vector<8x16xf32>
    %257 = arith.addf %255, %256 : vector<8x16xf32>
    %c0_113 = arith.constant 0 : index
    %c0_114 = arith.constant 0 : index
    %c96 = arith.constant 96 : index
    %258 = vector.load %arg2[%c0_113, %c0_114, %c96] : memref<1x8x128xf32, #tpu.memory_space<vmem>>, vector<1x8x16xf32>
    %259 = vector.shape_cast %258 : vector<1x8x16xf32> to vector<8x16xf32>
    %260 = arith.subf %257, %259 : vector<8x16xf32>
    %c0_115 = arith.constant 0 : index
    %c0_116 = arith.constant 0 : index
    %c96_117 = arith.constant 96 : index
    %261 = vector.load %arg12[%c0_115, %c0_116, %c96_117] : memref<1x8x128xf32, #tpu.memory_space<vmem>>, vector<1x8x16xf32>
    %262 = vector.shape_cast %261 : vector<1x8x16xf32> to vector<8x16xf32>
    %263 = vector.shape_cast %260 : vector<8x16xf32> to vector<1x8x16xf32>
    tpu.vector_store %arg12[%c0_115, %c0_116, %c96_117], %263 {strides = array<i32>} : memref<1x8x128xf32, #tpu.memory_space<vmem>>, vector<1x8x16xf32>,
    %264 = arith.truncf %260 : vector<8x16xf32> to vector<8x16xbf16>
    %cst_118 = arith.constant dense<0.000000e+00> : vector<8x32xf32>
    %265 = tpu.matmul %264, %6, %cst_118 {dimension_numbers = #tpu.dot_dimension_numbers<[1], [0], [0], [1], [0, 0, 1, 1], [], []>} : vector<8x16xbf16>, vector<16x32xbf16>, vector<8x32xf32> -> vector<8x32xf32>
    %266 = arith.mulf %253, %253 : vector<8x32xf32>
    %cst_119 = arith.constant 1.000000e+00 : f32
    %267 = vector.broadcast %cst_119 : f32 to vector<8x32xf32>
    %268 = arith.subf %267, %266 : vector<8x32xf32>
    %cst_120 = arith.constant 1.000000e-01 : f32
    %269 = vector.broadcast %cst_120 : f32 to vector<8x32xf32>
    %270 = arith.mulf %269, %268 : vector<8x32xf32>
    %271 = arith.mulf %270, %265 : vector<8x32xf32>
    %272 = arith.subf %252, %271 : vector<8x32xf32>
    %273 = arith.truncf %271 : vector<8x32xf32> to vector<8x32xbf16>
    %cst_121 = arith.constant dense<0.000000e+00> : vector<8x8xf32>
    %274 = tpu.matmul %273, %7, %cst_121 {dimension_numbers = #tpu.dot_dimension_numbers<[1], [0], [0], [1], [0, 0, 1, 1], [], []>} : vector<8x32xbf16>, vector<32x8xbf16>, vector<8x8xf32> -> vector<8x8xf32>
    %cst_122 = arith.constant 1.000000e-01 : f32
    %275 = vector.broadcast %cst_122 : f32 to vector<8x8xf32>
    %276 = arith.mulf %275, %274 : vector<8x8xf32>
    %277 = arith.subf %239, %276 : vector<8x8xf32>
    %278 = math.tanh %272 : vector<8x32xf32>
    %279 = arith.truncf %278 : vector<8x32xf32> to vector<8x32xbf16>
    %cst_123 = arith.constant dense<0.000000e+00> : vector<8x32xf32>
    %280 = tpu.matmul %279, %3, %cst_123 {dimension_numbers = #tpu.dot_dimension_numbers<[1], [0], [0], [1], [0, 0, 1, 1], [], []>} : vector<8x32xbf16>, vector<32x32xbf16>, vector<8x32xf32> -> vector<8x32xf32>
    %281 = arith.truncf %277 : vector<8x8xf32> to vector<8x8xbf16>
    %cst_124 = arith.constant dense<0.000000e+00> : vector<8x32xf32>
    %282 = tpu.matmul %281, %4, %cst_124 {dimension_numbers = #tpu.dot_dimension_numbers<[1], [0], [0], [1], [0, 0, 1, 1], [], []>} : vector<8x8xbf16>, vector<8x32xbf16>, vector<8x32xf32> -> vector<8x32xf32>
    %283 = arith.addf %280, %282 : vector<8x32xf32>
    %cst_125 = arith.constant 5.000000e-01 : f32
    %284 = vector.broadcast %cst_125 : f32 to vector<8x32xf32>
    %285 = arith.mulf %284, %272 : vector<8x32xf32>
    %286 = vector.broadcast %8 : vector<1x32xf32> to vector<8x32xf32>
    %287 = arith.addf %283, %286 : vector<8x32xf32>
    %cst_126 = arith.constant 5.000000e-01 : f32
    %288 = vector.broadcast %cst_126 : f32 to vector<8x32xf32>
    %289 = arith.mulf %288, %287 : vector<8x32xf32>
    %290 = arith.addf %285, %289 : vector<8x32xf32>
    %291 = math.tanh %290 : vector<8x32xf32>
    %292 = arith.truncf %291 : vector<8x32xf32> to vector<8x32xbf16>
    %cst_127 = arith.constant dense<0.000000e+00> : vector<8x16xf32>
    %293 = tpu.matmul %292, %5, %cst_127 {dimension_numbers = #tpu.dot_dimension_numbers<[1], [0], [0], [1], [0, 0, 1, 1], [], []>} : vector<8x32xbf16>, vector<32x16xbf16>, vector<8x16xf32> -> vector<8x16xf32>
    %294 = vector.broadcast %9 : vector<1x16xf32> to vector<8x16xf32>
    %295 = arith.addf %293, %294 : vector<8x16xf32>
    %c0_128 = arith.constant 0 : index
    %c0_129 = arith.constant 0 : index
    %c112 = arith.constant 112 : index
    %296 = vector.load %arg2[%c0_128, %c0_129, %c112] : memref<1x8x128xf32, #tpu.memory_space<vmem>>, vector<1x8x16xf32>
    %297 = vector.shape_cast %296 : vector<1x8x16xf32> to vector<8x16xf32>
    %298 = arith.subf %295, %297 : vector<8x16xf32>
    %c0_130 = arith.constant 0 : index
    %c0_131 = arith.constant 0 : index
    %c112_132 = arith.constant 112 : index
    %299 = vector.load %arg12[%c0_130, %c0_131, %c112_132] : memref<1x8x128xf32, #tpu.memory_space<vmem>>, vector<1x8x16xf32>
    %300 = vector.shape_cast %299 : vector<1x8x16xf32> to vector<8x16xf32>
    %301 = vector.shape_cast %298 : vector<8x16xf32> to vector<1x8x16xf32>
    tpu.vector_store %arg12[%c0_130, %c0_131, %c112_132], %301 {strides = array<i32>} : memref<1x8x128xf32, #tpu.memory_space<vmem>>, vector<1x8x16xf32>,
    %302 = arith.truncf %298 : vector<8x16xf32> to vector<8x16xbf16>
    %cst_133 = arith.constant dense<0.000000e+00> : vector<8x32xf32>
    %303 = tpu.matmul %302, %6, %cst_133 {dimension_numbers = #tpu.dot_dimension_numbers<[1], [0], [0], [1], [0, 0, 1, 1], [], []>} : vector<8x16xbf16>, vector<16x32xbf16>, vector<8x32xf32> -> vector<8x32xf32>
    %304 = arith.mulf %291, %291 : vector<8x32xf32>
    %cst_134 = arith.constant 1.000000e+00 : f32
    %305 = vector.broadcast %cst_134 : f32 to vector<8x32xf32>
    %306 = arith.subf %305, %304 : vector<8x32xf32>
    %cst_135 = arith.constant 1.000000e-01 : f32
    %307 = vector.broadcast %cst_135 : f32 to vector<8x32xf32>
    %308 = arith.mulf %307, %306 : vector<8x32xf32>
    %309 = arith.mulf %308, %303 : vector<8x32xf32>
    %310 = arith.subf %290, %309 : vector<8x32xf32>
    %311 = arith.truncf %309 : vector<8x32xf32> to vector<8x32xbf16>
    %cst_136 = arith.constant dense<0.000000e+00> : vector<8x8xf32>
    %312 = tpu.matmul %311, %7, %cst_136 {dimension_numbers = #tpu.dot_dimension_numbers<[1], [0], [0], [1], [0, 0, 1, 1], [], []>} : vector<8x32xbf16>, vector<32x8xbf16>, vector<8x8xf32> -> vector<8x8xf32>
    %cst_137 = arith.constant 1.000000e-01 : f32
    %313 = vector.broadcast %cst_137 : f32 to vector<8x8xf32>
    %314 = arith.mulf %313, %312 : vector<8x8xf32>
    %315 = arith.subf %277, %314 : vector<8x8xf32>
    %c0_138 = arith.constant 0 : index
    %c0_139 = arith.constant 0 : index
    %316 = vector.load %arg13[%c0_138, %c0_139] : memref<8x32xf32, #tpu.memory_space<vmem>>, vector<8x32xf32>
    tpu.vector_store %arg13[%c0_138, %c0_139], %310 {strides = array<i32>} : memref<8x32xf32, #tpu.memory_space<vmem>>, vector<8x32xf32>,
    %c0_140 = arith.constant 0 : index
    %c0_141 = arith.constant 0 : index
    %317 = vector.load %arg14[%c0_140, %c0_141] : memref<8x8xf32, #tpu.memory_space<vmem>>, vector<8x8xf32>
    tpu.vector_store %arg14[%c0_140, %c0_141], %315 {strides = array<i32>} : memref<8x8xf32, #tpu.memory_space<vmem>>, vector<8x8xf32>,
    return
  }
  func.func @transform_0(%arg0: i32, %arg1: i32) -> (i32, i32, i32) {
    %c0_i32 = arith.constant 0 : i32
    %c0_i32_0 = arith.constant 0 : i32
    return %arg1, %arg0, %c0_i32 : i32, i32, i32
  }
  func.func @transform_1(%arg0: i32, %arg1: i32) -> (i32, i32) {
    %c0_i32 = arith.constant 0 : i32
    %c0_i32_0 = arith.constant 0 : i32
    return %arg0, %c0_i32 : i32, i32
  }
  func.func @transform_2(%arg0: i32, %arg1: i32) -> (i32, i32) {
    %c0_i32 = arith.constant 0 : i32
    %c0_i32_0 = arith.constant 0 : i32
    return %arg0, %c0_i32 : i32, i32
  }
  func.func @transform_3(%arg0: i32, %arg1: i32) -> (i32, i32) {
    %c0_i32 = arith.constant 0 : i32
    %c0_i32_0 = arith.constant 0 : i32
    %c0_i32_1 = arith.constant 0 : i32
    return %c0_i32, %c0_i32_0 : i32, i32
  }
  func.func @transform_4(%arg0: i32, %arg1: i32) -> (i32, i32) {
    %c0_i32 = arith.constant 0 : i32
    %c0_i32_0 = arith.constant 0 : i32
    %c0_i32_1 = arith.constant 0 : i32
    return %c0_i32, %c0_i32_0 : i32, i32
  }
  func.func @transform_5(%arg0: i32, %arg1: i32) -> (i32, i32) {
    %c0_i32 = arith.constant 0 : i32
    %c0_i32_0 = arith.constant 0 : i32
    %c0_i32_1 = arith.constant 0 : i32
    return %c0_i32, %c0_i32_0 : i32, i32
  }
  func.func @transform_6(%arg0: i32, %arg1: i32) -> (i32, i32) {
    %c0_i32 = arith.constant 0 : i32
    %c0_i32_0 = arith.constant 0 : i32
    %c0_i32_1 = arith.constant 0 : i32
    return %c0_i32, %c0_i32_0 : i32, i32
  }
  func.func @transform_7(%arg0: i32, %arg1: i32) -> (i32, i32) {
    %c0_i32 = arith.constant 0 : i32
    %c0_i32_0 = arith.constant 0 : i32
    %c0_i32_1 = arith.constant 0 : i32
    return %c0_i32, %c0_i32_0 : i32, i32
  }
  func.func @transform_8(%arg0: i32, %arg1: i32) -> (i32, i32) {
    %c0_i32 = arith.constant 0 : i32
    %c0_i32_0 = arith.constant 0 : i32
    %c0_i32_1 = arith.constant 0 : i32
    return %c0_i32, %c0_i32_0 : i32, i32
  }
  func.func @transform_9(%arg0: i32, %arg1: i32) -> (i32, i32) {
    %c0_i32 = arith.constant 0 : i32
    %c0_i32_0 = arith.constant 0 : i32
    %c0_i32_1 = arith.constant 0 : i32
    return %c0_i32, %c0_i32_0 : i32, i32
  }
  func.func @transform_10(%arg0: i32, %arg1: i32) -> (i32, i32, i32) {
    %c0_i32 = arith.constant 0 : i32
    %c0_i32_0 = arith.constant 0 : i32
    return %arg1, %arg0, %c0_i32 : i32, i32, i32
  }
}

</mosaic_0001>

<llo_original>
// kernel: tpu_custom_call.1
$region0: #{tpu_custom_call.1}
  #allocation0 [shape = 'u32[]', space=smem, size = 0x4, offset = 0x4, fixed_abs, tag = 'smem constant byte address 0x4 - core index']
  #allocation1 [shape = 'u32[144,128]{1,0:T(1,128)}', space=vmem, size = 0x12000, scoped, tag = 'internal scratch']
  #allocation2 [shape = 'f32[8,32]{1,0:T(8,128)}', space=vmem, size = 0x1000, scoped, tag = 'scratch operand']
  #allocation3 [shape = 'f32[8,8]{1,0:T(8,128)}', space=vmem, size = 0x1000, scoped, tag = 'scratch operand']
  %s0 = inlined_call_operand.vmem [shape: f32[1,8,128], index: 0, kind: input, shape index: {}]
  %s1 = inlined_call_operand.vmem [shape: f32[8,8], index: 1, kind: input, shape index: {}]
  %s2 = inlined_call_operand.vmem [shape: f32[8,32], index: 2, kind: input, shape index: {}]
  %s3 = inlined_call_operand.vmem [shape: bf16[32,32], index: 3, kind: input, shape index: {}]
  %s4 = inlined_call_operand.hbm [shape: bf16[8,32], index: 4, kind: input, shape index: {}]
  %s5 = inlined_call_operand.vmem [shape: bf16[32,16], index: 5, kind: input, shape index: {}]
  %s6 = inlined_call_operand.hbm [shape: bf16[16,32], index: 6, kind: input, shape index: {}]
  %s7 = inlined_call_operand.vmem [shape: bf16[32,8], index: 7, kind: input, shape index: {}]
  %s8 = inlined_call_operand.vmem [shape: f32[1,16], index: 8, kind: input, shape index: {}]
  %s9 = inlined_call_operand.vmem [shape: f32[1,32], index: 9, kind: input, shape index: {}]
  %s10 = inlined_call_operand.hbm [shape: f32[1,8,128], index: 10, kind: output, shape index: {}]
  %s11 = sld [smem:[#allocation0]]
  $region62: #{tpu_custom_call.1} parent=0
    _
  %s13 = ssub.s32 1, %s11
  %s14 = scalar_select 0, %s13, %s11
  $region1: #{tpu_custom_call.1} parent=0
    #allocation4 [shape = 'u8[2048]{0}', space=vmem, size = 0x800, scoped, tag = 'input window, operand 4, single buffered']
    #allocation5 [shape = 's32[1]{0}', space=sflag, size = 0x4, scoped, tag = 'scoped memory for tpu_custom_call.1']
    #allocation6 [shape = 's32[1]{0}', space=sflag, size = 0x4, scoped, tag = 'scoped memory for tpu_custom_call.1']
    #allocation7 [shape = 'u8[4096]{0}', space=vmem, size = 0x1000, scoped, tag = 'input window, operand 6, single buffered']
    #allocation8 [shape = 's32[1]{0}', space=sflag, size = 0x4, scoped, tag = 'scoped memory for tpu_custom_call.1']
    #allocation9 [shape = 'u8[4096]{0}', space=vmem, size = 0x1000, scoped, tag = 'output window, operand 0, single buffered']
    %15 = vsyncpa [#allocation5], 0
    %16 = vsyncpa [#allocation8], 0
    %17 = vsyncpa [#allocation6], 0
    // Predicated region
    $region2: #{tpu_custom_call.1} parent=1 // pred_check
      _
    $region3: #{tpu_custom_call.1} parent=1 // pred_check_branch
      %19 = sbr.rel (0) target = $region5
    $region4: #{tpu_custom_call.1} parent=1 // pred_region
      _
    $region5: #{tpu_custom_call.1} parent=1 // pred_fallthru
      _
    // Predicated region
    $region6: #{tpu_custom_call.1} parent=1 // pred_check
      _
    $region7: #{tpu_custom_call.1} parent=1 // pred_check_branch
      %21 = sbr.rel (0) target = $region9
    $region8: #{tpu_custom_call.1} parent=1 // pred_region
      _
    $region9: #{tpu_custom_call.1} parent=1 // pred_fallthru
      _
    // Predicated region
    $region10: #{tpu_custom_call.1} parent=1 // pred_check
      _
    $region11: #{tpu_custom_call.1} parent=1 // pred_check_branch
      %23 = sbr.rel (0) target = $region13
    $region12: #{tpu_custom_call.1} parent=1 // pred_region
      _
    $region13: #{tpu_custom_call.1} parent=1 // pred_fallthru
      _
    // Predicated region
    $region14: #{tpu_custom_call.1} parent=1 // pred_check
      _
    $region15: #{tpu_custom_call.1} parent=1 // pred_check_branch
      %25 = sbr.rel (0) target = $region17
    $region16: #{tpu_custom_call.1} parent=1 // pred_region
      _
    $region17: #{tpu_custom_call.1} parent=1 // pred_fallthru
      _
    // Predicated region
    $region18: #{tpu_custom_call.1} parent=1 // pred_check
      _
    $region19: #{tpu_custom_call.1} parent=1 // pred_check_branch
      %27 = sbr.rel (0) target = $region21
    $region20: #{tpu_custom_call.1} parent=1 // pred_region
      %s29 = ssub.s32 64, 64
      %30 = vsyncadd [#allocation5], %s29
      %s32 = sshll.u32 [#allocation4], 4
      %s33 = int_to_ptr.vmem [resolvable:$true] %s32
      %35 = dma.hbm_to_vmem [thread:$0]  %s4, 64, %s33, [#allocation5]
    $region21: #{tpu_custom_call.1} parent=1 // pred_fallthru
      _
    // Predicated region
    $region22: #{tpu_custom_call.1} parent=1 // pred_check
      _
    $region23: #{tpu_custom_call.1} parent=1 // pred_check_branch
      %37 = sbr.rel (0) target = $region25
    $region24: #{tpu_custom_call.1} parent=1 // pred_region
      _
    $region25: #{tpu_custom_call.1} parent=1 // pred_fallthru
      _
    // Predicated region
    $region26: #{tpu_custom_call.1} parent=1 // pred_check
      _
    $region27: #{tpu_custom_call.1} parent=1 // pred_check_branch
      %39 = sbr.rel (0) target = $region29
    $region28: #{tpu_custom_call.1} parent=1 // pred_region
      %s41 = ssub.s32 128, 128
      %42 = vsyncadd [#allocation8], %s41
      %s43 = sshll.u32 [#allocation7], 4
      %s44 = int_to_ptr.vmem [resolvable:$true] %s43
      %49 = dma.hbm_to_vmem [thread:$0]  %s6, 128, %s44, [#allocation8], 64, 64, 4
    $region29: #{tpu_custom_call.1} parent=1 // pred_fallthru
      _
    // Predicated region
    $region30: #{tpu_custom_call.1} parent=1 // pred_check
      _
    $region31: #{tpu_custom_call.1} parent=1 // pred_check_branch
      %51 = sbr.rel (0) target = $region33
    $region32: #{tpu_custom_call.1} parent=1 // pred_region
      _
    $region33: #{tpu_custom_call.1} parent=1 // pred_fallthru
      _
    // Predicated region
    $region34: #{tpu_custom_call.1} parent=1 // pred_check
      _
    $region35: #{tpu_custom_call.1} parent=1 // pred_check_branch
      %53 = sbr.rel (0) target = $region37
    $region36: #{tpu_custom_call.1} parent=1 // pred_region
      _
    $region37: #{tpu_custom_call.1} parent=1 // pred_fallthru
      _
    // Predicated region
    $region38: #{tpu_custom_call.1} parent=1 // pred_check
      _
    $region39: #{tpu_custom_call.1} parent=1 // pred_check_branch
      %55 = sbr.rel (0) target = $region41
    $region40: #{tpu_custom_call.1} parent=1 // pred_region
      _
    $region41: #{tpu_custom_call.1} parent=1 // pred_fallthru
      _
    // Predicated region
    $region42: #{tpu_custom_call.1} parent=1 // pred_check
      _
    $region43: #{tpu_custom_call.1} parent=1 // pred_check_branch
      %57 = sbr.rel (0) target = $region45
    $region44: #{tpu_custom_call.1} parent=1 // pred_region
      %58 = dma.done [#allocation5], 64
    $region45: #{tpu_custom_call.1} parent=1 // pred_fallthru
      _
    // Predicated region
    $region46: #{tpu_custom_call.1} parent=1 // pred_check
      _
    $region47: #{tpu_custom_call.1} parent=1 // pred_check_branch
      %60 = sbr.rel (0) target = $region49
    $region48: #{tpu_custom_call.1} parent=1 // pred_region
      %61 = dma.done [#allocation8], 128
    $region49: #{tpu_custom_call.1} parent=1 // pred_fallthru
      _
    %p63 = scmp.eq.s32.totalorder 0, 0
    // Predicated region
    $region50: #{tpu_custom_call.1} parent=1 // pred_check
      %p64 = pneg %p63
    $region51: #{tpu_custom_call.1} parent=1 // pred_check_branch
      %66 = sbr.rel (%p64) target = $region53
    $region52: #{tpu_custom_call.1} parent=1 // pred_region
      %v67 = vld [vmem:[%s2] sm:$0xff]
      %vm68 = vcmask 261120
      %69 = vst.msk [vmem:[#allocation2] sm:$0xff] %vm68, %v67
      %v70 = vld [vmem:[%s1] sm:$0xff]
      %vm71 = vcmask 64512
      %72 = vst.msk [vmem:[#allocation3] sm:$0xff] %vm71, %v70
    $region53: #{tpu_custom_call.1} parent=1 // pred_fallthru
      _
    %v73 = vld [vmem:[%s3] sm:$0xf]
    %v74 = vld [vmem:[%s3 + $0x4] sm:$0xf]
    %v75 = vld [vmem:[%s3 + $0x8] sm:$0xf]
    %v76 = vld [vmem:[%s3 + $0xc] sm:$0xf]
    %v77 = vld [vmem:[#allocation4] sm:$0xf]
    %v78 = vld [vmem:[%s5] sm:$0xf]
    %v79 = vld [vmem:[%s5 + $0x4] sm:$0xf]
    %v80 = vld [vmem:[%s5 + $0x8] sm:$0xf]
    %v81 = vld [vmem:[%s5 + $0xc] sm:$0xf]
    %v82 = vld [vmem:[#allocation7] sm:$0xf]
    %v83 = vld [vmem:[#allocation7 + $0x4] sm:$0xf]
    %v84 = vld [vmem:[%s7] sm:$0xf]
    %v85 = vld [vmem:[%s7 + $0x4] sm:$0xf]
    %v86 = vld [vmem:[%s7 + $0x8] sm:$0xf]
    %v87 = vld [vmem:[%s7 + $0xc] sm:$0xf]
    %v88 = vld [vmem:[%s9] sm:$0x1]
    %v89 = vld [vmem:[%s8] sm:$0x1]
    %v90 = vld [vmem:[#allocation2] sm:$0xff]
    %v91 = vld [vmem:[#allocation3] sm:$0xff]
    %v92 = vtanh.pop %v90
    %v93 = vpack.c.bf16 %v92, %v92
    %v94 = vpack.c.bf16 %v91, %v91
    %vm95 = vcmask 64512
    %v97 = vsel %vm95, %v94, 0
    %vm99 = vcmask 1043456
    %v101 = vsel %vm99, %v77, 0
    %103 = vmatprep.subr.bf16.mxu0 0
    %104 = vmatpush1.bf16.msra.mxu0 0
    %105 = vmatprep.subr.bf16.mxu0 0
    %106 = vmatpush1.bf16.msra.mxu0 0
    %107 = vmatprep.subr.bf16.mxu0 0
    %108 = vmatpush1.bf16.msra.mxu0 0
    %109 = vmatprep.subr.bf16.mxu0 0
    %110 = vmatpush1.bf16.msra.mxu0 0
    %111 = vmatprep.subr.bf16.mxu0 0
    %112 = vmatpush1.bf16.msra.mxu0 0
    %113 = vmatprep.subr.bf16.mxu0 0
    %114 = vmatpush1.bf16.msra.mxu0 0
    %115 = vmatprep.subr.bf16.mxu0 0
    %116 = vmatpush1.bf16.msra.mxu0 0
    %117 = vmatprep.subr.bf16.mxu0 0
    %118 = vmatpush1.bf16.msra.mxu0 %v101
    %119 = vmatprep.subr.bf16.mxu0 0
    %120 = vmatpush2.bf16.msra.mxu0 0
    %121 = vmatprep.subr.bf16.mxu0 0
    %122 = vmatpush2.bf16.msra.mxu0 0
    %123 = vmatprep.subr.bf16.mxu0 0
    %124 = vmatpush2.bf16.msra.mxu0 0
    %125 = vmatprep.subr.bf16.mxu0 0
    %126 = vmatpush2.bf16.msra.mxu0 0
    %127 = vmatprep.subr.bf16.mxu0 0
    %128 = vmatpush2.bf16.msra.mxu0 0
    %129 = vmatprep.subr.bf16.mxu0 0
    %130 = vmatpush2.bf16.msra.mxu0 0
    %131 = vmatprep.subr.bf16.mxu0 0
    %132 = vmatpush2.bf16.msra.mxu0 0
    %133 = vmatprep.subr.bf16.mxu0 0
    %134 = vmatpush2.bf16.msra.mxu0 0
    %135 = vmatprep.mubr.bf16.mxu0 0
    %136 = vmatmul.mubr.bf16.gmra.mxu0 %v97
    %v137 = vpop.f32.mrf.mxu0
    %v138 = vadd.f32 0.0, %v137
    %v139 = vpop.f32.mrf.mxu0
    %v140 = vpop.f32.mrf.mxu0
    %v141 = vpop.f32.mrf.mxu0
    %142 = vdwg.mxu0
    %v147 = vunpack.c.l.b16 %v73
    %v148 = vunpack.c.l.b16 %v74
    %v149 = vunpack.c.l.b16 %v75
    %v150 = vunpack.c.l.b16 %v76
    %v151 = vpack.c.b16 %v148, %v147
    %v152 = vpack.c.b16 %v150, %v149
    %vm155 = vcmask 261120
    %v157 = vsel %vm155, %v93, 0
    %159 = vmatprep.subr.bf16.mxu0 0
    %160 = vmatpush1.bf16.msra.mxu0 0
    %161 = vmatprep.subr.bf16.mxu0 0
    %162 = vmatpush1.bf16.msra.mxu0 0
    %163 = vmatprep.subr.bf16.mxu0 0
    %164 = vmatpush1.bf16.msra.mxu0 0
    %165 = vmatprep.subr.bf16.mxu0 0
    %166 = vmatpush1.bf16.msra.mxu0 0
    %167 = vmatprep.subr.bf16.mxu0 0
    %168 = vmatpush1.bf16.msra.mxu0 0
    %169 = vmatprep.subr.bf16.mxu0 0
    %170 = vmatpush1.bf16.msra.mxu0 0
    %171 = vmatprep.subr.bf16.mxu0 0
    %172 = vmatpush1.bf16.msra.mxu0 %v152
    %173 = vmatprep.subr.bf16.mxu0 0
    %174 = vmatpush1.bf16.msra.mxu0 %v151
    %175 = vmatprep.subr.bf16.mxu0 0
    %176 = vmatpush2.bf16.msra.mxu0 0
    %177 = vmatprep.subr.bf16.mxu0 0
    %178 = vmatpush2.bf16.msra.mxu0 0
    %179 = vmatprep.subr.bf16.mxu0 0
    %180 = vmatpush2.bf16.msra.mxu0 0
    %181 = vmatprep.subr.bf16.mxu0 0
    %182 = vmatpush2.bf16.msra.mxu0 0
    %183 = vmatprep.subr.bf16.mxu0 0
    %184 = vmatpush2.bf16.msra.mxu0 0
    %185 = vmatprep.subr.bf16.mxu0 0
    %186 = vmatpush2.bf16.msra.mxu0 0
    %187 = vmatprep.subr.bf16.mxu0 0
    %188 = vmatpush2.bf16.msra.mxu0 0
    %189 = vmatprep.subr.bf16.mxu0 0
    %190 = vmatpush2.bf16.msra.mxu0 0
    %191 = vmatprep.mubr.bf16.mxu0 0
    %192 = vmatmul.mubr.bf16.gmra.mxu0 %v157
    %v193 = vpop.f32.mrf.mxu0
    %v194 = vadd.f32 %v138, %v193
    %v195 = vpop.f32.mrf.mxu0
    %v196 = vpop.f32.mrf.mxu0
    %v197 = vpop.f32.mrf.mxu0
    %198 = vdwg.mxu0
    %v199 = vmul.f32 %v90, 0.5
    %v201 = vlaneseq
    %v202 = vshrl.u32 %v201, 7
    %v203 = vsub.s32 0, %v202
    %v204 = vrot.slane %v88, %v203
    %v206 = vadd.f32 %v194, %v204
    %v207 = vmul.f32 %v206, 0.5
    %v208 = vadd.f32 %v199, %v207
    %v209 = vtanh.pop %v208
    %v210 = vpack.c.bf16 %v209, %v209
    %v212 = vlaneseq
    %v213 = vshrl.u32 %v212, 7
    %v214 = vsub.s32 0, %v213
    %v215 = vrot.slane %v89, %v214
    %v221 = vunpack.c.l.b16 %v78
    %v222 = vunpack.c.l.b16 %v79
    %v223 = vunpack.c.l.b16 %v80
    %v224 = vunpack.c.l.b16 %v81
    %v225 = vpack.c.b16 %v222, %v221
    %v226 = vpack.c.b16 %v224, %v223
    %v230 = vsel %vm155, %v210, 0
    %232 = vmatprep.subr.bf16.mxu0 0
    %233 = vmatpush1.bf16.msra.mxu0 0
    %234 = vmatprep.subr.bf16.mxu0 0
    %235 = vmatpush1.bf16.msra.mxu0 0
    %236 = vmatprep.subr.bf16.mxu0 0
    %237 = vmatpush1.bf16.msra.mxu0 0
    %238 = vmatprep.subr.bf16.mxu0 0
    %239 = vmatpush1.bf16.msra.mxu0 0
    %240 = vmatprep.subr.bf16.mxu0 0
    %241 = vmatpush1.bf16.msra.mxu0 0
    %242 = vmatprep.subr.bf16.mxu0 0
    %243 = vmatpush1.bf16.msra.mxu0 0
    %244 = vmatprep.subr.bf16.mxu0 0
    %245 = vmatpush1.bf16.msra.mxu0 %v226
    %246 = vmatprep.subr.bf16.mxu0 0
    %247 = vmatpush1.bf16.msra.mxu0 %v225
    %248 = vmatprep.subr.bf16.mxu0 0
    %249 = vmatpush2.bf16.msra.mxu0 0
    %250 = vmatprep.subr.bf16.mxu0 0
    %251 = vmatpush2.bf16.msra.mxu0 0
    %252 = vmatprep.subr.bf16.mxu0 0
    %253 = vmatpush2.bf16.msra.mxu0 0
    %254 = vmatprep.subr.bf16.mxu0 0
    %255 = vmatpush2.bf16.msra.mxu0 0
    %256 = vmatprep.subr.bf16.mxu0 0
    %257 = vmatpush2.bf16.msra.mxu0 0
    %258 = vmatprep.subr.bf16.mxu0 0
    %259 = vmatpush2.bf16.msra.mxu0 0
    %260 = vmatprep.subr.bf16.mxu0 0
    %261 = vmatpush2.bf16.msra.mxu0 0
    %262 = vmatprep.subr.bf16.mxu0 0
    %263 = vmatpush2.bf16.msra.mxu0 0
    %264 = vmatprep.mubr.bf16.mxu0 0
    %265 = vmatmul.mubr.bf16.gmra.mxu0 %v230
    %v266 = vpop.f32.mrf.mxu0
    %v267 = vadd.f32 %v215, %v266
    %v268 = vpop.f32.mrf.mxu0
    %v269 = vpop.f32.mrf.mxu0
    %v270 = vpop.f32.mrf.mxu0
    %271 = vdwg.mxu0
    %v272 = vld [vmem:[%s0] sm:$0xff]
    %v273 = vsub.f32 %v267, %v272
    %vm274 = vcmask 130048
    %275 = vst.msk [vmem:[#allocation9] sm:$0xff] %vm274, %v273
    %v276 = vpack.c.bf16 %v273, %v273
    %v279 = vunpack.c.l.b16 %v82
    %v280 = vunpack.c.l.b16 %v83
    %v281 = vpack.c.b16 %v280, %v279
    %v284 = vsel %vm274, %v276, 0
    %286 = vmatprep.subr.bf16.mxu0 0
    %287 = vmatpush1.bf16.msra.mxu0 0
    %288 = vmatprep.subr.bf16.mxu0 0
    %289 = vmatpush1.bf16.msra.mxu0 0
    %290 = vmatprep.subr.bf16.mxu0 0
    %291 = vmatpush1.bf16.msra.mxu0 0
    %292 = vmatprep.subr.bf16.mxu0 0
    %293 = vmatpush1.bf16.msra.mxu0 0
    %294 = vmatprep.subr.bf16.mxu0 0
    %295 = vmatpush1.bf16.msra.mxu0 0
    %296 = vmatprep.subr.bf16.mxu0 0
    %297 = vmatpush1.bf16.msra.mxu0 0
    %298 = vmatprep.subr.bf16.mxu0 0
    %299 = vmatpush1.bf16.msra.mxu0 0
    %300 = vmatprep.subr.bf16.mxu0 0
    %301 = vmatpush1.bf16.msra.mxu0 %v281
    %302 = vmatprep.subr.bf16.mxu0 0
    %303 = vmatpush2.bf16.msra.mxu0 0
    %304 = vmatprep.subr.bf16.mxu0 0
    %305 = vmatpush2.bf16.msra.mxu0 0
    %306 = vmatprep.subr.bf16.mxu0 0
    %307 = vmatpush2.bf16.msra.mxu0 0
    %308 = vmatprep.subr.bf16.mxu0 0
    %309 = vmatpush2.bf16.msra.mxu0 0
    %310 = vmatprep.subr.bf16.mxu0 0
    %311 = vmatpush2.bf16.msra.mxu0 0
    %312 = vmatprep.subr.bf16.mxu0 0
    %313 = vmatpush2.bf16.msra.mxu0 0
    %314 = vmatprep.subr.bf16.mxu0 0
    %315 = vmatpush2.bf16.msra.mxu0 0
    %316 = vmatprep.subr.bf16.mxu0 0
    %317 = vmatpush2.bf16.msra.mxu0 0
    %318 = vmatprep.mubr.bf16.mxu0 0
    %319 = vmatmul.mubr.bf16.gmra.mxu0 %v284
    %v320 = vpop.f32.mrf.mxu0
    %v321 = vadd.f32 0.0, %v320
    %v322 = vpop.f32.mrf.mxu0
    %v323 = vpop.f32.mrf.mxu0
    %v324 = vpop.f32.mrf.mxu0
    %325 = vdwg.mxu0
    %v326 = vmul.f32 %v209, %v209
    %v327 = vsub.f32 1.0, %v326
    %v328 = vmul.f32 %v327, 0.1
    %v329 = vmul.f32 %v328, %v321
    %v330 = vsub.f32 %v208, %v329
    %v331 = vpack.c.bf16 %v329, %v329
    %v336 = vunpack.c.l.b16 %v84
    %v337 = vunpack.c.l.b16 %v85
    %v338 = vunpack.c.l.b16 %v86
    %v339 = vunpack.c.l.b16 %v87
    %v340 = vpack.c.b16 %v337, %v336
    %v341 = vpack.c.b16 %v339, %v338
    %v345 = vsel %vm155, %v331, 0
    %347 = vmatprep.subr.bf16.mxu0 0
    %348 = vmatpush1.bf16.msra.mxu0 0
    %349 = vmatprep.subr.bf16.mxu0 0
    %350 = vmatpush1.bf16.msra.mxu0 0
    %351 = vmatprep.subr.bf16.mxu0 0
    %352 = vmatpush1.bf16.msra.mxu0 0
    %353 = vmatprep.subr.bf16.mxu0 0
    %354 = vmatpush1.bf16.msra.mxu0 0
    %355 = vmatprep.subr.bf16.mxu0 0
    %356 = vmatpush1.bf16.msra.mxu0 0
    %357 = vmatprep.subr.bf16.mxu0 0
    %358 = vmatpush1.bf16.msra.mxu0 0
    %359 = vmatprep.subr.bf16.mxu0 0
    %360 = vmatpush1.bf16.msra.mxu0 %v341
    %361 = vmatprep.subr.bf16.mxu0 0
    %362 = vmatpush1.bf16.msra.mxu0 %v340
    %363 = vmatprep.subr.bf16.mxu0 0
    %364 = vmatpush2.bf16.msra.mxu0 0
    %365 = vmatprep.subr.bf16.mxu0 0
    %366 = vmatpush2.bf16.msra.mxu0 0
    %367 = vmatprep.subr.bf16.mxu0 0
    %368 = vmatpush2.bf16.msra.mxu0 0
    %369 = vmatprep.subr.bf16.mxu0 0
    %370 = vmatpush2.bf16.msra.mxu0 0
    %371 = vmatprep.subr.bf16.mxu0 0
    %372 = vmatpush2.bf16.msra.mxu0 0
    %373 = vmatprep.subr.bf16.mxu0 0
    %374 = vmatpush2.bf16.msra.mxu0 0
    %375 = vmatprep.subr.bf16.mxu0 0
    %376 = vmatpush2.bf16.msra.mxu0 0
    %377 = vmatprep.subr.bf16.mxu0 0
    %378 = vmatpush2.bf16.msra.mxu0 0
    %379 = vmatprep.mubr.bf16.mxu0 0
    %380 = vmatmul.mubr.bf16.gmra.mxu0 %v345
    %v381 = vpop.f32.mrf.mxu0
    %v382 = vadd.f32 0.0, %v381
    %v383 = vpop.f32.mrf.mxu0
    %v384 = vpop.f32.mrf.mxu0
    %v385 = vpop.f32.mrf.mxu0
    %386 = vdwg.mxu0
    %v387 = vmul.f32 %v382, 0.1
    %v388 = vsub.f32 %v91, %v387
    %v389 = vtanh.pop %v330
    %v390 = vpack.c.bf16 %v389, %v389
    %v391 = vpack.c.bf16 %v388, %v388
    %v393 = vsel %vm95, %v391, 0
    %395 = vmatprep.subr.bf16.mxu0 0
    %396 = vmatpush1.bf16.msra.mxu0 0
    %397 = vmatprep.subr.bf16.mxu0 0
    %398 = vmatpush1.bf16.msra.mxu0 0
    %399 = vmatprep.subr.bf16.mxu0 0
    %400 = vmatpush1.bf16.msra.mxu0 0
    %401 = vmatprep.subr.bf16.mxu0 0
    %402 = vmatpush1.bf16.msra.mxu0 0
    %403 = vmatprep.subr.bf16.mxu0 0
    %404 = vmatpush1.bf16.msra.mxu0 0
    %405 = vmatprep.subr.bf16.mxu0 0
    %406 = vmatpush1.bf16.msra.mxu0 0
    %407 = vmatprep.subr.bf16.mxu0 0
    %408 = vmatpush1.bf16.msra.mxu0 0
    %409 = vmatprep.subr.bf16.mxu0 0
    %410 = vmatpush1.bf16.msra.mxu0 %v101
    %411 = vmatprep.subr.bf16.mxu0 0
    %412 = vmatpush2.bf16.msra.mxu0 0
    %413 = vmatprep.subr.bf16.mxu0 0
    %414 = vmatpush2.bf16.msra.mxu0 0
    %415 = vmatprep.subr.bf16.mxu0 0
    %416 = vmatpush2.bf16.msra.mxu0 0
    %417 = vmatprep.subr.bf16.mxu0 0
    %418 = vmatpush2.bf16.msra.mxu0 0
    %419 = vmatprep.subr.bf16.mxu0 0
    %420 = vmatpush2.bf16.msra.mxu0 0
    %421 = vmatprep.subr.bf16.mxu0 0
    %422 = vmatpush2.bf16.msra.mxu0 0
    %423 = vmatprep.subr.bf16.mxu0 0
    %424 = vmatpush2.bf16.msra.mxu0 0
    %425 = vmatprep.subr.bf16.mxu0 0
    %426 = vmatpush2.bf16.msra.mxu0 0
    %427 = vmatprep.mubr.bf16.mxu0 0
    %428 = vmatmul.mubr.bf16.gmra.mxu0 %v393
    %v429 = vpop.f32.mrf.mxu0
    %v430 = vadd.f32 0.0, %v429
    %v431 = vpop.f32.mrf.mxu0
    %v432 = vpop.f32.mrf.mxu0
    %v433 = vpop.f32.mrf.mxu0
    %434 = vdwg.mxu0
    %v436 = vsel %vm155, %v390, 0
    %438 = vmatprep.subr.bf16.mxu0 0
    %439 = vmatpush1.bf16.msra.mxu0 0
    %440 = vmatprep.subr.bf16.mxu0 0
    %441 = vmatpush1.bf16.msra.mxu0 0
    %442 = vmatprep.subr.bf16.mxu0 0
    %443 = vmatpush1.bf16.msra.mxu0 0
    %444 = vmatprep.subr.bf16.mxu0 0
    %445 = vmatpush1.bf16.msra.mxu0 0
    %446 = vmatprep.subr.bf16.mxu0 0
    %447 = vmatpush1.bf16.msra.mxu0 0
    %448 = vmatprep.subr.bf16.mxu0 0
    %449 = vmatpush1.bf16.msra.mxu0 0
    %450 = vmatprep.subr.bf16.mxu0 0
    %451 = vmatpush1.bf16.msra.mxu0 %v152
    %452 = vmatprep.subr.bf16.mxu0 0
    %453 = vmatpush1.bf16.msra.mxu0 %v151
    %454 = vmatprep.subr.bf16.mxu0 0
    %455 = vmatpush2.bf16.msra.mxu0 0
    %456 = vmatprep.subr.bf16.mxu0 0
    %457 = vmatpush2.bf16.msra.mxu0 0
    %458 = vmatprep.subr.bf16.mxu0 0
    %459 = vmatpush2.bf16.msra.mxu0 0
    %460 = vmatprep.subr.bf16.mxu0 0
    %461 = vmatpush2.bf16.msra.mxu0 0
    %462 = vmatprep.subr.bf16.mxu0 0
    %463 = vmatpush2.bf16.msra.mxu0 0
    %464 = vmatprep.subr.bf16.mxu0 0
    %465 = vmatpush2.bf16.msra.mxu0 0
    %466 = vmatprep.subr.bf16.mxu0 0
    %467 = vmatpush2.bf16.msra.mxu0 0
    %468 = vmatprep.subr.bf16.mxu0 0
    %469 = vmatpush2.bf16.msra.mxu0 0
    %470 = vmatprep.mubr.bf16.mxu0 0
    %471 = vmatmul.mubr.bf16.gmra.mxu0 %v436
    %v472 = vpop.f32.mrf.mxu0
    %v473 = vadd.f32 %v430, %v472
    %v474 = vpop.f32.mrf.mxu0
    %v475 = vpop.f32.mrf.mxu0
    %v476 = vpop.f32.mrf.mxu0
    %477 = vdwg.mxu0
    %v478 = vmul.f32 %v330, 0.5
    %v479 = vadd.f32 %v473, %v204
    %v480 = vmul.f32 %v479, 0.5
    %v481 = vadd.f32 %v478, %v480
    %v482 = vtanh.pop %v481
    %v483 = vpack.c.bf16 %v482, %v482
    %v485 = vsel %vm155, %v483, 0
    %487 = vmatprep.subr.bf16.mxu0 0
    %488 = vmatpush1.bf16.msra.mxu0 0
    %489 = vmatprep.subr.bf16.mxu0 0
    %490 = vmatpush1.bf16.msra.mxu0 0
    %491 = vmatprep.subr.bf16.mxu0 0
    %492 = vmatpush1.bf16.msra.mxu0 0
    %493 = vmatprep.subr.bf16.mxu0 0
    %494 = vmatpush1.bf16.msra.mxu0 0
    %495 = vmatprep.subr.bf16.mxu0 0
    %496 = vmatpush1.bf16.msra.mxu0 0
    %497 = vmatprep.subr.bf16.mxu0 0
    %498 = vmatpush1.bf16.msra.mxu0 0
    %499 = vmatprep.subr.bf16.mxu0 0
    %500 = vmatpush1.bf16.msra.mxu0 %v226
    %501 = vmatprep.subr.bf16.mxu0 0
    %502 = vmatpush1.bf16.msra.mxu0 %v225
    %503 = vmatprep.subr.bf16.mxu0 0
    %504 = vmatpush2.bf16.msra.mxu0 0
    %505 = vmatprep.subr.bf16.mxu0 0
    %506 = vmatpush2.bf16.msra.mxu0 0
    %507 = vmatprep.subr.bf16.mxu0 0
    %508 = vmatpush2.bf16.msra.mxu0 0
    %509 = vmatprep.subr.bf16.mxu0 0
    %510 = vmatpush2.bf16.msra.mxu0 0
    %511 = vmatprep.subr.bf16.mxu0 0
    %512 = vmatpush2.bf16.msra.mxu0 0
    %513 = vmatprep.subr.bf16.mxu0 0
    %514 = vmatpush2.bf16.msra.mxu0 0
    %515 = vmatprep.subr.bf16.mxu0 0
    %516 = vmatpush2.bf16.msra.mxu0 0
    %517 = vmatprep.subr.bf16.mxu0 0
    %518 = vmatpush2.bf16.msra.mxu0 0
    %519 = vmatprep.mubr.bf16.mxu0 0
    %520 = vmatmul.mubr.bf16.gmra.mxu0 %v485
    %v521 = vpop.f32.mrf.mxu0
    %v522 = vadd.f32 %v215, %v521
    %v523 = vpop.f32.mrf.mxu0
    %v524 = vpop.f32.mrf.mxu0
    %v525 = vpop.f32.mrf.mxu0
    %526 = vdwg.mxu0
    %v527 = vld [vmem:[%s0] sm:$0xff]
    %529 = vrot.lane.b32.xlu0 %v527, 112
    %v530 = vpop.permute.xlu0 %529
    %v532 = vsub.f32 %v522, %v530
    %534 = vrot.lane.b32.xlu0 %v532, 16
    %v535 = vpop.permute.xlu0 %534
    %vm537 = vcmask 261248
    %538 = vst.msk [vmem:[#allocation9] sm:$0xff] %vm537, %v535
    %v539 = vpack.c.bf16 %v532, %v532
    %v541 = vsel %vm274, %v539, 0
    %543 = vmatprep.subr.bf16.mxu0 0
    %544 = vmatpush1.bf16.msra.mxu0 0
    %545 = vmatprep.subr.bf16.mxu0 0
    %546 = vmatpush1.bf16.msra.mxu0 0
    %547 = vmatprep.subr.bf16.mxu0 0
    %548 = vmatpush1.bf16.msra.mxu0 0
    %549 = vmatprep.subr.bf16.mxu0 0
    %550 = vmatpush1.bf16.msra.mxu0 0
    %551 = vmatprep.subr.bf16.mxu0 0
    %552 = vmatpush1.bf16.msra.mxu0 0
    %553 = vmatprep.subr.bf16.mxu0 0
    %554 = vmatpush1.bf16.msra.mxu0 0
    %555 = vmatprep.subr.bf16.mxu0 0
    %556 = vmatpush1.bf16.msra.mxu0 0
    %557 = vmatprep.subr.bf16.mxu0 0
    %558 = vmatpush1.bf16.msra.mxu0 %v281
    %559 = vmatprep.subr.bf16.mxu0 0
    %560 = vmatpush2.bf16.msra.mxu0 0
    %561 = vmatprep.subr.bf16.mxu0 0
    %562 = vmatpush2.bf16.msra.mxu0 0
    %563 = vmatprep.subr.bf16.mxu0 0
    %564 = vmatpush2.bf16.msra.mxu0 0
    %565 = vmatprep.subr.bf16.mxu0 0
    %566 = vmatpush2.bf16.msra.mxu0 0
    %567 = vmatprep.subr.bf16.mxu0 0
    %568 = vmatpush2.bf16.msra.mxu0 0
    %569 = vmatprep.subr.bf16.mxu0 0
    %570 = vmatpush2.bf16.msra.mxu0 0
    %571 = vmatprep.subr.bf16.mxu0 0
    %572 = vmatpush2.bf16.msra.mxu0 0
    %573 = vmatprep.subr.bf16.mxu0 0
    %574 = vmatpush2.bf16.msra.mxu0 0
    %575 = vmatprep.mubr.bf16.mxu0 0
    %576 = vmatmul.mubr.bf16.gmra.mxu0 %v541
    %v577 = vpop.f32.mrf.mxu0
    %v578 = vadd.f32 0.0, %v577
    %v579 = vpop.f32.mrf.mxu0
    %v580 = vpop.f32.mrf.mxu0
    %v581 = vpop.f32.mrf.mxu0
    %582 = vdwg.mxu0
    %v583 = vmul.f32 %v482, %v482
    %v584 = vsub.f32 1.0, %v583
    %v585 = vmul.f32 %v584, 0.1
    %v586 = vmul.f32 %v585, %v578
    %v587 = vsub.f32 %v481, %v586
    %v588 = vpack.c.bf16 %v586, %v586
    %v590 = vsel %vm155, %v588, 0
    %592 = vmatprep.subr.bf16.mxu0 0
    %593 = vmatpush1.bf16.msra.mxu0 0
    %594 = vmatprep.subr.bf16.mxu0 0
    %595 = vmatpush1.bf16.msra.mxu0 0
    %596 = vmatprep.subr.bf16.mxu0 0
    %597 = vmatpush1.bf16.msra.mxu0 0
    %598 = vmatprep.subr.bf16.mxu0 0
    %599 = vmatpush1.bf16.msra.mxu0 0
    %600 = vmatprep.subr.bf16.mxu0 0
    %601 = vmatpush1.bf16.msra.mxu0 0
    %602 = vmatprep.subr.bf16.mxu0 0
    %603 = vmatpush1.bf16.msra.mxu0 0
    %604 = vmatprep.subr.bf16.mxu0 0
    %605 = vmatpush1.bf16.msra.mxu0 %v341
    %606 = vmatprep.subr.bf16.mxu0 0
    %607 = vmatpush1.bf16.msra.mxu0 %v340
    %608 = vmatprep.subr.bf16.mxu0 0
    %609 = vmatpush2.bf16.msra.mxu0 0
    %610 = vmatprep.subr.bf16.mxu0 0
    %611 = vmatpush2.bf16.msra.mxu0 0
    %612 = vmatprep.subr.bf16.mxu0 0
    %613 = vmatpush2.bf16.msra.mxu0 0
    %614 = vmatprep.subr.bf16.mxu0 0
    %615 = vmatpush2.bf16.msra.mxu0 0
    %616 = vmatprep.subr.bf16.mxu0 0
    %617 = vmatpush2.bf16.msra.mxu0 0
    %618 = vmatprep.subr.bf16.mxu0 0
    %619 = vmatpush2.bf16.msra.mxu0 0
    %620 = vmatprep.subr.bf16.mxu0 0
    %621 = vmatpush2.bf16.msra.mxu0 0
    %622 = vmatprep.subr.bf16.mxu0 0
    %623 = vmatpush2.bf16.msra.mxu0 0
    %624 = vmatprep.mubr.bf16.mxu0 0
    %625 = vmatmul.mubr.bf16.gmra.mxu0 %v590
    %v626 = vpop.f32.mrf.mxu0
    %v627 = vadd.f32 0.0, %v626
    %v628 = vpop.f32.mrf.mxu0
    %v629 = vpop.f32.mrf.mxu0
    %v630 = vpop.f32.mrf.mxu0
    %631 = vdwg.mxu0
    %v632 = vmul.f32 %v627, 0.1
    %v633 = vsub.f32 %v388, %v632
    %v634 = vtanh.pop %v587
    %v635 = vpack.c.bf16 %v634, %v634
    %v636 = vpack.c.bf16 %v633, %v633
    %v638 = vsel %vm95, %v636, 0
    %640 = vmatprep.subr.bf16.mxu0 0
    %641 = vmatpush1.bf16.msra.mxu0 0
    %642 = vmatprep.subr.bf16.mxu0 0
    %643 = vmatpush1.bf16.msra.mxu0 0
    %644 = vmatprep.subr.bf16.mxu0 0
    %645 = vmatpush1.bf16.msra.mxu0 0
    %646 = vmatprep.subr.bf16.mxu0 0
    %647 = vmatpush1.bf16.msra.mxu0 0
    %648 = vmatprep.subr.bf16.mxu0 0
    %649 = vmatpush1.bf16.msra.mxu0 0
    %650 = vmatprep.subr.bf16.mxu0 0
    %651 = vmatpush1.bf16.msra.mxu0 0
    %652 = vmatprep.subr.bf16.mxu0 0
    %653 = vmatpush1.bf16.msra.mxu0 0
    %654 = vmatprep.subr.bf16.mxu0 0
    %655 = vmatpush1.bf16.msra.mxu0 %v101
    %656 = vmatprep.subr.bf16.mxu0 0
    %657 = vmatpush2.bf16.msra.mxu0 0
    %658 = vmatprep.subr.bf16.mxu0 0
    %659 = vmatpush2.bf16.msra.mxu0 0
    %660 = vmatprep.subr.bf16.mxu0 0
    %661 = vmatpush2.bf16.msra.mxu0 0
    %662 = vmatprep.subr.bf16.mxu0 0
    %663 = vmatpush2.bf16.msra.mxu0 0
    %664 = vmatprep.subr.bf16.mxu0 0
    %665 = vmatpush2.bf16.msra.mxu0 0
    %666 = vmatprep.subr.bf16.mxu0 0
    %667 = vmatpush2.bf16.msra.mxu0 0
    %668 = vmatprep.subr.bf16.mxu0 0
    %669 = vmatpush2.bf16.msra.mxu0 0
    %670 = vmatprep.subr.bf16.mxu0 0
    %671 = vmatpush2.bf16.msra.mxu0 0
    %672 = vmatprep.mubr.bf16.mxu0 0
    %673 = vmatmul.mubr.bf16.gmra.mxu0 %v638
    %v674 = vpop.f32.mrf.mxu0
    %v675 = vadd.f32 0.0, %v674
    %v676 = vpop.f32.mrf.mxu0
    %v677 = vpop.f32.mrf.mxu0
    %v678 = vpop.f32.mrf.mxu0
    %679 = vdwg.mxu0
    %v681 = vsel %vm155, %v635, 0
    %683 = vmatprep.subr.bf16.mxu0 0
    %684 = vmatpush1.bf16.msra.mxu0 0
    %685 = vmatprep.subr.bf16.mxu0 0
    %686 = vmatpush1.bf16.msra.mxu0 0
    %687 = vmatprep.subr.bf16.mxu0 0
    %688 = vmatpush1.bf16.msra.mxu0 0
    %689 = vmatprep.subr.bf16.mxu0 0
    %690 = vmatpush1.bf16.msra.mxu0 0
    %691 = vmatprep.subr.bf16.mxu0 0
    %692 = vmatpush1.bf16.msra.mxu0 0
    %693 = vmatprep.subr.bf16.mxu0 0
    %694 = vmatpush1.bf16.msra.mxu0 0
    %695 = vmatprep.subr.bf16.mxu0 0
    %696 = vmatpush1.bf16.msra.mxu0 %v152
    %697 = vmatprep.subr.bf16.mxu0 0
    %698 = vmatpush1.bf16.msra.mxu0 %v151
    %699 = vmatprep.subr.bf16.mxu0 0
    %700 = vmatpush2.bf16.msra.mxu0 0
    %701 = vmatprep.subr.bf16.mxu0 0
    %702 = vmatpush2.bf16.msra.mxu0 0
    %703 = vmatprep.subr.bf16.mxu0 0
    %704 = vmatpush2.bf16.msra.mxu0 0
    %705 = vmatprep.subr.bf16.mxu0 0
    %706 = vmatpush2.bf16.msra.mxu0 0
    %707 = vmatprep.subr.bf16.mxu0 0
    %708 = vmatpush2.bf16.msra.mxu0 0
    %709 = vmatprep.subr.bf16.mxu0 0
    %710 = vmatpush2.bf16.msra.mxu0 0
    %711 = vmatprep.subr.bf16.mxu0 0
    %712 = vmatpush2.bf16.msra.mxu0 0
    %713 = vmatprep.subr.bf16.mxu0 0
    %714 = vmatpush2.bf16.msra.mxu0 0
    %715 = vmatprep.mubr.bf16.mxu0 0
    %716 = vmatmul.mubr.bf16.gmra.mxu0 %v681
    %v717 = vpop.f32.mrf.mxu0
    %v718 = vadd.f32 %v675, %v717
    %v719 = vpop.f32.mrf.mxu0
    %v720 = vpop.f32.mrf.mxu0
    %v721 = vpop.f32.mrf.mxu0
    %722 = vdwg.mxu0
    %v723 = vmul.f32 %v587, 0.5
    %v724 = vadd.f32 %v718, %v204
    %v725 = vmul.f32 %v724, 0.5
    %v726 = vadd.f32 %v723, %v725
    %v727 = vtanh.pop %v726
    %v728 = vpack.c.bf16 %v727, %v727
    %v730 = vsel %vm155, %v728, 0
    %732 = vmatprep.subr.bf16.mxu0 0
    %733 = vmatpush1.bf16.msra.mxu0 0
    %734 = vmatprep.subr.bf16.mxu0 0
    %735 = vmatpush1.bf16.msra.mxu0 0
    %736 = vmatprep.subr.bf16.mxu0 0
    %737 = vmatpush1.bf16.msra.mxu0 0
    %738 = vmatprep.subr.bf16.mxu0 0
    %739 = vmatpush1.bf16.msra.mxu0 0
    %740 = vmatprep.subr.bf16.mxu0 0
    %741 = vmatpush1.bf16.msra.mxu0 0
    %742 = vmatprep.subr.bf16.mxu0 0
    %743 = vmatpush1.bf16.msra.mxu0 0
    %744 = vmatprep.subr.bf16.mxu0 0
    %745 = vmatpush1.bf16.msra.mxu0 %v226
    %746 = vmatprep.subr.bf16.mxu0 0
    %747 = vmatpush1.bf16.msra.mxu0 %v225
    %748 = vmatprep.subr.bf16.mxu0 0
    %749 = vmatpush2.bf16.msra.mxu0 0
    %750 = vmatprep.subr.bf16.mxu0 0
    %751 = vmatpush2.bf16.msra.mxu0 0
    %752 = vmatprep.subr.bf16.mxu0 0
    %753 = vmatpush2.bf16.msra.mxu0 0
    %754 = vmatprep.subr.bf16.mxu0 0
    %755 = vmatpush2.bf16.msra.mxu0 0
    %756 = vmatprep.subr.bf16.mxu0 0
    %757 = vmatpush2.bf16.msra.mxu0 0
    %758 = vmatprep.subr.bf16.mxu0 0
    %759 = vmatpush2.bf16.msra.mxu0 0
    %760 = vmatprep.subr.bf16.mxu0 0
    %761 = vmatpush2.bf16.msra.mxu0 0
    %762 = vmatprep.subr.bf16.mxu0 0
    %763 = vmatpush2.bf16.msra.mxu0 0
    %764 = vmatprep.mubr.bf16.mxu0 0
    %765 = vmatmul.mubr.bf16.gmra.mxu0 %v730
    %v766 = vpop.f32.mrf.mxu0
    %v767 = vadd.f32 %v215, %v766
    %v768 = vpop.f32.mrf.mxu0
    %v769 = vpop.f32.mrf.mxu0
    %v770 = vpop.f32.mrf.mxu0
    %771 = vdwg.mxu0
    %v772 = vld [vmem:[%s0] sm:$0xff]
    %774 = vrot.lane.b32.xlu0 %v772, 96
    %v775 = vpop.permute.xlu0 %774
    %v777 = vsub.f32 %v767, %v775
    %779 = vrot.lane.b32.xlu0 %v777, 32
    %v780 = vpop.permute.xlu0 %779
    %vm782 = vcmask 392448
    %783 = vst.msk [vmem:[#allocation9] sm:$0xff] %vm782, %v780
    %v784 = vpack.c.bf16 %v777, %v777
    %v786 = vsel %vm274, %v784, 0
    %788 = vmatprep.subr.bf16.mxu0 0
    %789 = vmatpush1.bf16.msra.mxu0 0
    %790 = vmatprep.subr.bf16.mxu0 0
    %791 = vmatpush1.bf16.msra.mxu0 0
    %792 = vmatprep.subr.bf16.mxu0 0
    %793 = vmatpush1.bf16.msra.mxu0 0
    %794 = vmatprep.subr.bf16.mxu0 0
    %795 = vmatpush1.bf16.msra.mxu0 0
    %796 = vmatprep.subr.bf16.mxu0 0
    %797 = vmatpush1.bf16.msra.mxu0 0
    %798 = vmatprep.subr.bf16.mxu0 0
    %799 = vmatpush1.bf16.msra.mxu0 0
    %800 = vmatprep.subr.bf16.mxu0 0
    %801 = vmatpush1.bf16.msra.mxu0 0
    %802 = vmatprep.subr.bf16.mxu0 0
    %803 = vmatpush1.bf16.msra.mxu0 %v281
    %804 = vmatprep.subr.bf16.mxu0 0
    %805 = vmatpush2.bf16.msra.mxu0 0
    %806 = vmatprep.subr.bf16.mxu0 0
    %807 = vmatpush2.bf16.msra.mxu0 0
    %808 = vmatprep.subr.bf16.mxu0 0
    %809 = vmatpush2.bf16.msra.mxu0 0
    %810 = vmatprep.subr.bf16.mxu0 0
    %811 = vmatpush2.bf16.msra.mxu0 0
    %812 = vmatprep.subr.bf16.mxu0 0
    %813 = vmatpush2.bf16.msra.mxu0 0
    %814 = vmatprep.subr.bf16.mxu0 0
    %815 = vmatpush2.bf16.msra.mxu0 0
    %816 = vmatprep.subr.bf16.mxu0 0
    %817 = vmatpush2.bf16.msra.mxu0 0
    %818 = vmatprep.subr.bf16.mxu0 0
    %819 = vmatpush2.bf16.msra.mxu0 0
    %820 = vmatprep.mubr.bf16.mxu0 0
    %821 = vmatmul.mubr.bf16.gmra.mxu0 %v786
    %v822 = vpop.f32.mrf.mxu0
    %v823 = vadd.f32 0.0, %v822
    %v824 = vpop.f32.mrf.mxu0
    %v825 = vpop.f32.mrf.mxu0
    %v826 = vpop.f32.mrf.mxu0
    %827 = vdwg.mxu0
    %v828 = vmul.f32 %v727, %v727
    %v829 = vsub.f32 1.0, %v828
    %v830 = vmul.f32 %v829, 0.1
    %v831 = vmul.f32 %v830, %v823
    %v832 = vsub.f32 %v726, %v831
    %v833 = vpack.c.bf16 %v831, %v831
    %v835 = vsel %vm155, %v833, 0
    %837 = vmatprep.subr.bf16.mxu0 0
    %838 = vmatpush1.bf16.msra.mxu0 0
    %839 = vmatprep.subr.bf16.mxu0 0
    %840 = vmatpush1.bf16.msra.mxu0 0
    %841 = vmatprep.subr.bf16.mxu0 0
    %842 = vmatpush1.bf16.msra.mxu0 0
    %843 = vmatprep.subr.bf16.mxu0 0
    %844 = vmatpush1.bf16.msra.mxu0 0
    %845 = vmatprep.subr.bf16.mxu0 0
    %846 = vmatpush1.bf16.msra.mxu0 0
    %847 = vmatprep.subr.bf16.mxu0 0
    %848 = vmatpush1.bf16.msra.mxu0 0
    %849 = vmatprep.subr.bf16.mxu0 0
    %850 = vmatpush1.bf16.msra.mxu0 %v341
    %851 = vmatprep.subr.bf16.mxu0 0
    %852 = vmatpush1.bf16.msra.mxu0 %v340
    %853 = vmatprep.subr.bf16.mxu0 0
    %854 = vmatpush2.bf16.msra.mxu0 0
    %855 = vmatprep.subr.bf16.mxu0 0
    %856 = vmatpush2.bf16.msra.mxu0 0
    %857 = vmatprep.subr.bf16.mxu0 0
    %858 = vmatpush2.bf16.msra.mxu0 0
    %859 = vmatprep.subr.bf16.mxu0 0
    %860 = vmatpush2.bf16.msra.mxu0 0
    %861 = vmatprep.subr.bf16.mxu0 0
    %862 = vmatpush2.bf16.msra.mxu0 0
    %863 = vmatprep.subr.bf16.mxu0 0
    %864 = vmatpush2.bf16.msra.mxu0 0
    %865 = vmatprep.subr.bf16.mxu0 0
    %866 = vmatpush2.bf16.msra.mxu0 0
    %867 = vmatprep.subr.bf16.mxu0 0
    %868 = vmatpush2.bf16.msra.mxu0 0
    %869 = vmatprep.mubr.bf16.mxu0 0
    %870 = vmatmul.mubr.bf16.gmra.mxu0 %v835
    %v871 = vpop.f32.mrf.mxu0
    %v872 = vadd.f32 0.0, %v871
    %v873 = vpop.f32.mrf.mxu0
    %v874 = vpop.f32.mrf.mxu0
    %v875 = vpop.f32.mrf.mxu0
    %876 = vdwg.mxu0
    %v877 = vmul.f32 %v872, 0.1
    %v878 = vsub.f32 %v633, %v877
    %v879 = vtanh.pop %v832
    %v880 = vpack.c.bf16 %v879, %v879
    %v881 = vpack.c.bf16 %v878, %v878
    %v883 = vsel %vm95, %v881, 0
    %885 = vmatprep.subr.bf16.mxu0 0
    %886 = vmatpush1.bf16.msra.mxu0 0
    %887 = vmatprep.subr.bf16.mxu0 0
    %888 = vmatpush1.bf16.msra.mxu0 0
    %889 = vmatprep.subr.bf16.mxu0 0
    %890 = vmatpush1.bf16.msra.mxu0 0
    %891 = vmatprep.subr.bf16.mxu0 0
    %892 = vmatpush1.bf16.msra.mxu0 0
    %893 = vmatprep.subr.bf16.mxu0 0
    %894 = vmatpush1.bf16.msra.mxu0 0
    %895 = vmatprep.subr.bf16.mxu0 0
    %896 = vmatpush1.bf16.msra.mxu0 0
    %897 = vmatprep.subr.bf16.mxu0 0
    %898 = vmatpush1.bf16.msra.mxu0 0
    %899 = vmatprep.subr.bf16.mxu0 0
    %900 = vmatpush1.bf16.msra.mxu0 %v101
    %901 = vmatprep.subr.bf16.mxu0 0
    %902 = vmatpush2.bf16.msra.mxu0 0
    %903 = vmatprep.subr.bf16.mxu0 0
    %904 = vmatpush2.bf16.msra.mxu0 0
    %905 = vmatprep.subr.bf16.mxu0 0
    %906 = vmatpush2.bf16.msra.mxu0 0
    %907 = vmatprep.subr.bf16.mxu0 0
    %908 = vmatpush2.bf16.msra.mxu0 0
    %909 = vmatprep.subr.bf16.mxu0 0
    %910 = vmatpush2.bf16.msra.mxu0 0
    %911 = vmatprep.subr.bf16.mxu0 0
    %912 = vmatpush2.bf16.msra.mxu0 0
    %913 = vmatprep.subr.bf16.mxu0 0
    %914 = vmatpush2.bf16.msra.mxu0 0
    %915 = vmatprep.subr.bf16.mxu0 0
    %916 = vmatpush2.bf16.msra.mxu0 0
    %917 = vmatprep.mubr.bf16.mxu0 0
    %918 = vmatmul.mubr.bf16.gmra.mxu0 %v883
    %v919 = vpop.f32.mrf.mxu0
    %v920 = vadd.f32 0.0, %v919
    %v921 = vpop.f32.mrf.mxu0
    %v922 = vpop.f32.mrf.mxu0
    %v923 = vpop.f32.mrf.mxu0
    %924 = vdwg.mxu0
    %v926 = vsel %vm155, %v880, 0
    %928 = vmatprep.subr.bf16.mxu0 0
    %929 = vmatpush1.bf16.msra.mxu0 0
    %930 = vmatprep.subr.bf16.mxu0 0
    %931 = vmatpush1.bf16.msra.mxu0 0
    %932 = vmatprep.subr.bf16.mxu0 0
    %933 = vmatpush1.bf16.msra.mxu0 0
    %934 = vmatprep.subr.bf16.mxu0 0
    %935 = vmatpush1.bf16.msra.mxu0 0
    %936 = vmatprep.subr.bf16.mxu0 0
    %937 = vmatpush1.bf16.msra.mxu0 0
    %938 = vmatprep.subr.bf16.mxu0 0
    %939 = vmatpush1.bf16.msra.mxu0 0
    %940 = vmatprep.subr.bf16.mxu0 0
    %941 = vmatpush1.bf16.msra.mxu0 %v152
    %942 = vmatprep.subr.bf16.mxu0 0
    %943 = vmatpush1.bf16.msra.mxu0 %v151
    %944 = vmatprep.subr.bf16.mxu0 0
    %945 = vmatpush2.bf16.msra.mxu0 0
    %946 = vmatprep.subr.bf16.mxu0 0
    %947 = vmatpush2.bf16.msra.mxu0 0
    %948 = vmatprep.subr.bf16.mxu0 0
    %949 = vmatpush2.bf16.msra.mxu0 0
    %950 = vmatprep.subr.bf16.mxu0 0
    %951 = vmatpush2.bf16.msra.mxu0 0
    %952 = vmatprep.subr.bf16.mxu0 0
    %953 = vmatpush2.bf16.msra.mxu0 0
    %954 = vmatprep.subr.bf16.mxu0 0
    %955 = vmatpush2.bf16.msra.mxu0 0
    %956 = vmatprep.subr.bf16.mxu0 0
    %957 = vmatpush2.bf16.msra.mxu0 0
    %958 = vmatprep.subr.bf16.mxu0 0
    %959 = vmatpush2.bf16.msra.mxu0 0
    %960 = vmatprep.mubr.bf16.mxu0 0
    %961 = vmatmul.mubr.bf16.gmra.mxu0 %v926
    %v962 = vpop.f32.mrf.mxu0
    %v963 = vadd.f32 %v920, %v962
    %v964 = vpop.f32.mrf.mxu0
    %v965 = vpop.f32.mrf.mxu0
    %v966 = vpop.f32.mrf.mxu0
    %967 = vdwg.mxu0
    %v968 = vmul.f32 %v832, 0.5
    %v969 = vadd.f32 %v963, %v204
    %v970 = vmul.f32 %v969, 0.5
    %v971 = vadd.f32 %v968, %v970
    %v972 = vtanh.pop %v971
    %v973 = vpack.c.bf16 %v972, %v972
    %v975 = vsel %vm155, %v973, 0
    %977 = vmatprep.subr.bf16.mxu0 0
    %978 = vmatpush1.bf16.msra.mxu0 0
    %979 = vmatprep.subr.bf16.mxu0 0
    %980 = vmatpush1.bf16.msra.mxu0 0
    %981 = vmatprep.subr.bf16.mxu0 0
    %982 = vmatpush1.bf16.msra.mxu0 0
    %983 = vmatprep.subr.bf16.mxu0 0
    %984 = vmatpush1.bf16.msra.mxu0 0
    %985 = vmatprep.subr.bf16.mxu0 0
    %986 = vmatpush1.bf16.msra.mxu0 0
    %987 = vmatprep.subr.bf16.mxu0 0
    %988 = vmatpush1.bf16.msra.mxu0 0
    %989 = vmatprep.subr.bf16.mxu0 0
    %990 = vmatpush1.bf16.msra.mxu0 %v226
    %991 = vmatprep.subr.bf16.mxu0 0
    %992 = vmatpush1.bf16.msra.mxu0 %v225
    %993 = vmatprep.subr.bf16.mxu0 0
    %994 = vmatpush2.bf16.msra.mxu0 0
    %995 = vmatprep.subr.bf16.mxu0 0
    %996 = vmatpush2.bf16.msra.mxu0 0
    %997 = vmatprep.subr.bf16.mxu0 0
    %998 = vmatpush2.bf16.msra.mxu0 0
    %999 = vmatprep.subr.bf16.mxu0 0
    %1000 = vmatpush2.bf16.msra.mxu0 0
    %1001 = vmatprep.subr.bf16.mxu0 0
    %1002 = vmatpush2.bf16.msra.mxu0 0
    %1003 = vmatprep.subr.bf16.mxu0 0
    %1004 = vmatpush2.bf16.msra.mxu0 0
    %1005 = vmatprep.subr.bf16.mxu0 0
    %1006 = vmatpush2.bf16.msra.mxu0 0
    %1007 = vmatprep.subr.bf16.mxu0 0
    %1008 = vmatpush2.bf16.msra.mxu0 0
    %1009 = vmatprep.mubr.bf16.mxu0 0
    %1010 = vmatmul.mubr.bf16.gmra.mxu0 %v975
    %v1011 = vpop.f32.mrf.mxu0
    %v1012 = vadd.f32 %v215, %v1011
    %v1013 = vpop.f32.mrf.mxu0
    %v1014 = vpop.f32.mrf.mxu0
    %v1015 = vpop.f32.mrf.mxu0
    %1016 = vdwg.mxu0
    %v1017 = vld [vmem:[%s0] sm:$0xff]
    %1019 = vrot.lane.b32.xlu0 %v1017, 80
    %v1020 = vpop.permute.xlu0 %1019
    %v1022 = vsub.f32 %v1012, %v1020
    %1024 = vrot.lane.b32.xlu0 %v1022, 48
    %v1025 = vpop.permute.xlu0 %1024
    %vm1027 = vcmask 523648
    %1028 = vst.msk [vmem:[#allocation9] sm:$0xff] %vm1027, %v1025
    %v1029 = vpack.c.bf16 %v1022, %v1022
    %v1031 = vsel %vm274, %v1029, 0
    %1033 = vmatprep.subr.bf16.mxu0 0
    %1034 = vmatpush1.bf16.msra.mxu0 0
    %1035 = vmatprep.subr.bf16.mxu0 0
    %1036 = vmatpush1.bf16.msra.mxu0 0
    %1037 = vmatprep.subr.bf16.mxu0 0
    %1038 = vmatpush1.bf16.msra.mxu0 0
    %1039 = vmatprep.subr.bf16.mxu0 0
    %1040 = vmatpush1.bf16.msra.mxu0 0
    %1041 = vmatprep.subr.bf16.mxu0 0
    %1042 = vmatpush1.bf16.msra.mxu0 0
    %1043 = vmatprep.subr.bf16.mxu0 0
    %1044 = vmatpush1.bf16.msra.mxu0 0
    %1045 = vmatprep.subr.bf16.mxu0 0
    %1046 = vmatpush1.bf16.msra.mxu0 0
    %1047 = vmatprep.subr.bf16.mxu0 0
    %1048 = vmatpush1.bf16.msra.mxu0 %v281
    %1049 = vmatprep.subr.bf16.mxu0 0
    %1050 = vmatpush2.bf16.msra.mxu0 0
    %1051 = vmatprep.subr.bf16.mxu0 0
    %1052 = vmatpush2.bf16.msra.mxu0 0
    %1053 = vmatprep.subr.bf16.mxu0 0
    %1054 = vmatpush2.bf16.msra.mxu0 0
    %1055 = vmatprep.subr.bf16.mxu0 0
    %1056 = vmatpush2.bf16.msra.mxu0 0
    %1057 = vmatprep.subr.bf16.mxu0 0
    %1058 = vmatpush2.bf16.msra.mxu0 0
    %1059 = vmatprep.subr.bf16.mxu0 0
    %1060 = vmatpush2.bf16.msra.mxu0 0
    %1061 = vmatprep.subr.bf16.mxu0 0
    %1062 = vmatpush2.bf16.msra.mxu0 0
    %1063 = vmatprep.subr.bf16.mxu0 0
    %1064 = vmatpush2.bf16.msra.mxu0 0
    %1065 = vmatprep.mubr.bf16.mxu0 0
    %1066 = vmatmul.mubr.bf16.gmra.mxu0 %v1031
    %v1067 = vpop.f32.mrf.mxu0
    %v1068 = vadd.f32 0.0, %v1067
    %v1069 = vpop.f32.mrf.mxu0
    %v1070 = vpop.f32.mrf.mxu0
    %v1071 = vpop.f32.mrf.mxu0
    %1072 = vdwg.mxu0
    %v1073 = vmul.f32 %v972, %v972
    %v1074 = vsub.f32 1.0, %v1073
    %v1075 = vmul.f32 %v1074, 0.1
    %v1076 = vmul.f32 %v1075, %v1068
    %v1077 = vsub.f32 %v971, %v1076
    %v1078 = vpack.c.bf16 %v1076, %v1076
    %v1080 = vsel %vm155, %v1078, 0
    %1082 = vmatprep.subr.bf16.mxu0 0
    %1083 = vmatpush1.bf16.msra.mxu0 0
    %1084 = vmatprep.subr.bf16.mxu0 0
    %1085 = vmatpush1.bf16.msra.mxu0 0
    %1086 = vmatprep.subr.bf16.mxu0 0
    %1087 = vmatpush1.bf16.msra.mxu0 0
    %1088 = vmatprep.subr.bf16.mxu0 0
    %1089 = vmatpush1.bf16.msra.mxu0 0
    %1090 = vmatprep.subr.bf16.mxu0 0
    %1091 = vmatpush1.bf16.msra.mxu0 0
    %1092 = vmatprep.subr.bf16.mxu0 0
    %1093 = vmatpush1.bf16.msra.mxu0 0
    %1094 = vmatprep.subr.bf16.mxu0 0
    %1095 = vmatpush1.bf16.msra.mxu0 %v341
    %1096 = vmatprep.subr.bf16.mxu0 0
    %1097 = vmatpush1.bf16.msra.mxu0 %v340
    %1098 = vmatprep.subr.bf16.mxu0 0
    %1099 = vmatpush2.bf16.msra.mxu0 0
    %1100 = vmatprep.subr.bf16.mxu0 0
    %1101 = vmatpush2.bf16.msra.mxu0 0
    %1102 = vmatprep.subr.bf16.mxu0 0
    %1103 = vmatpush2.bf16.msra.mxu0 0
    %1104 = vmatprep.subr.bf16.mxu0 0
    %1105 = vmatpush2.bf16.msra.mxu0 0
    %1106 = vmatprep.subr.bf16.mxu0 0
    %1107 = vmatpush2.bf16.msra.mxu0 0
    %1108 = vmatprep.subr.bf16.mxu0 0
    %1109 = vmatpush2.bf16.msra.mxu0 0
    %1110 = vmatprep.subr.bf16.mxu0 0
    %1111 = vmatpush2.bf16.msra.mxu0 0
    %1112 = vmatprep.subr.bf16.mxu0 0
    %1113 = vmatpush2.bf16.msra.mxu0 0
    %1114 = vmatprep.mubr.bf16.mxu0 0
    %1115 = vmatmul.mubr.bf16.gmra.mxu0 %v1080
    %v1116 = vpop.f32.mrf.mxu0
    %v1117 = vadd.f32 0.0, %v1116
    %v1118 = vpop.f32.mrf.mxu0
    %v1119 = vpop.f32.mrf.mxu0
    %v1120 = vpop.f32.mrf.mxu0
    %1121 = vdwg.mxu0
    %v1122 = vmul.f32 %v1117, 0.1
    %v1123 = vsub.f32 %v878, %v1122
    %v1124 = vtanh.pop %v1077
    %v1125 = vpack.c.bf16 %v1124, %v1124
    %v1126 = vpack.c.bf16 %v1123, %v1123
    %v1128 = vsel %vm95, %v1126, 0
    %1130 = vmatprep.subr.bf16.mxu0 0
    %1131 = vmatpush1.bf16.msra.mxu0 0
    %1132 = vmatprep.subr.bf16.mxu0 0
    %1133 = vmatpush1.bf16.msra.mxu0 0
    %1134 = vmatprep.subr.bf16.mxu0 0
    %1135 = vmatpush1.bf16.msra.mxu0 0
    %1136 = vmatprep.subr.bf16.mxu0 0
    %1137 = vmatpush1.bf16.msra.mxu0 0
    %1138 = vmatprep.subr.bf16.mxu0 0
    %1139 = vmatpush1.bf16.msra.mxu0 0
    %1140 = vmatprep.subr.bf16.mxu0 0
    %1141 = vmatpush1.bf16.msra.mxu0 0
    %1142 = vmatprep.subr.bf16.mxu0 0
    %1143 = vmatpush1.bf16.msra.mxu0 0
    %1144 = vmatprep.subr.bf16.mxu0 0
    %1145 = vmatpush1.bf16.msra.mxu0 %v101
    %1146 = vmatprep.subr.bf16.mxu0 0
    %1147 = vmatpush2.bf16.msra.mxu0 0
    %1148 = vmatprep.subr.bf16.mxu0 0
    %1149 = vmatpush2.bf16.msra.mxu0 0
    %1150 = vmatprep.subr.bf16.mxu0 0
    %1151 = vmatpush2.bf16.msra.mxu0 0
    %1152 = vmatprep.subr.bf16.mxu0 0
    %1153 = vmatpush2.bf16.msra.mxu0 0
    %1154 = vmatprep.subr.bf16.mxu0 0
    %1155 = vmatpush2.bf16.msra.mxu0 0
    %1156 = vmatprep.subr.bf16.mxu0 0
    %1157 = vmatpush2.bf16.msra.mxu0 0
    %1158 = vmatprep.subr.bf16.mxu0 0
    %1159 = vmatpush2.bf16.msra.mxu0 0
    %1160 = vmatprep.subr.bf16.mxu0 0
    %1161 = vmatpush2.bf16.msra.mxu0 0
    %1162 = vmatprep.mubr.bf16.mxu0 0
    %1163 = vmatmul.mubr.bf16.gmra.mxu0 %v1128
    %v1164 = vpop.f32.mrf.mxu0
    %v1165 = vadd.f32 0.0, %v1164
    %v1166 = vpop.f32.mrf.mxu0
    %v1167 = vpop.f32.mrf.mxu0
    %v1168 = vpop.f32.mrf.mxu0
    %1169 = vdwg.mxu0
    %v1171 = vsel %vm155, %v1125, 0
    %1173 = vmatprep.subr.bf16.mxu0 0
    %1174 = vmatpush1.bf16.msra.mxu0 0
    %1175 = vmatprep.subr.bf16.mxu0 0
    %1176 = vmatpush1.bf16.msra.mxu0 0
    %1177 = vmatprep.subr.bf16.mxu0 0
    %1178 = vmatpush1.bf16.msra.mxu0 0
    %1179 = vmatprep.subr.bf16.mxu0 0
    %1180 = vmatpush1.bf16.msra.mxu0 0
    %1181 = vmatprep.subr.bf16.mxu0 0
    %1182 = vmatpush1.bf16.msra.mxu0 0
    %1183 = vmatprep.subr.bf16.mxu0 0
    %1184 = vmatpush1.bf16.msra.mxu0 0
    %1185 = vmatprep.subr.bf16.mxu0 0
    %1186 = vmatpush1.bf16.msra.mxu0 %v152
    %1187 = vmatprep.subr.bf16.mxu0 0
    %1188 = vmatpush1.bf16.msra.mxu0 %v151
    %1189 = vmatprep.subr.bf16.mxu0 0
    %1190 = vmatpush2.bf16.msra.mxu0 0
    %1191 = vmatprep.subr.bf16.mxu0 0
    %1192 = vmatpush2.bf16.msra.mxu0 0
    %1193 = vmatprep.subr.bf16.mxu0 0
    %1194 = vmatpush2.bf16.msra.mxu0 0
    %1195 = vmatprep.subr.bf16.mxu0 0
    %1196 = vmatpush2.bf16.msra.mxu0 0
    %1197 = vmatprep.subr.bf16.mxu0 0
    %1198 = vmatpush2.bf16.msra.mxu0 0
    %1199 = vmatprep.subr.bf16.mxu0 0
    %1200 = vmatpush2.bf16.msra.mxu0 0
    %1201 = vmatprep.subr.bf16.mxu0 0
    %1202 = vmatpush2.bf16.msra.mxu0 0
    %1203 = vmatprep.subr.bf16.mxu0 0
    %1204 = vmatpush2.bf16.msra.mxu0 0
    %1205 = vmatprep.mubr.bf16.mxu0 0
    %1206 = vmatmul.mubr.bf16.gmra.mxu0 %v1171
    %v1207 = vpop.f32.mrf.mxu0
    %v1208 = vadd.f32 %v1165, %v1207
    %v1209 = vpop.f32.mrf.mxu0
    %v1210 = vpop.f32.mrf.mxu0
    %v1211 = vpop.f32.mrf.mxu0
    %1212 = vdwg.mxu0
    %v1213 = vmul.f32 %v1077, 0.5
    %v1214 = vadd.f32 %v1208, %v204
    %v1215 = vmul.f32 %v1214, 0.5
    %v1216 = vadd.f32 %v1213, %v1215
    %v1217 = vtanh.pop %v1216
    %v1218 = vpack.c.bf16 %v1217, %v1217
    %v1220 = vsel %vm155, %v1218, 0
    %1222 = vmatprep.subr.bf16.mxu0 0
    %1223 = vmatpush1.bf16.msra.mxu0 0
    %1224 = vmatprep.subr.bf16.mxu0 0
    %1225 = vmatpush1.bf16.msra.mxu0 0
    %1226 = vmatprep.subr.bf16.mxu0 0
    %1227 = vmatpush1.bf16.msra.mxu0 0
    %1228 = vmatprep.subr.bf16.mxu0 0
    %1229 = vmatpush1.bf16.msra.mxu0 0
    %1230 = vmatprep.subr.bf16.mxu0 0
    %1231 = vmatpush1.bf16.msra.mxu0 0
    %1232 = vmatprep.subr.bf16.mxu0 0
    %1233 = vmatpush1.bf16.msra.mxu0 0
    %1234 = vmatprep.subr.bf16.mxu0 0
    %1235 = vmatpush1.bf16.msra.mxu0 %v226
    %1236 = vmatprep.subr.bf16.mxu0 0
    %1237 = vmatpush1.bf16.msra.mxu0 %v225
    %1238 = vmatprep.subr.bf16.mxu0 0
    %1239 = vmatpush2.bf16.msra.mxu0 0
    %1240 = vmatprep.subr.bf16.mxu0 0
    %1241 = vmatpush2.bf16.msra.mxu0 0
    %1242 = vmatprep.subr.bf16.mxu0 0
    %1243 = vmatpush2.bf16.msra.mxu0 0
    %1244 = vmatprep.subr.bf16.mxu0 0
    %1245 = vmatpush2.bf16.msra.mxu0 0
    %1246 = vmatprep.subr.bf16.mxu0 0
    %1247 = vmatpush2.bf16.msra.mxu0 0
    %1248 = vmatprep.subr.bf16.mxu0 0
    %1249 = vmatpush2.bf16.msra.mxu0 0
    %1250 = vmatprep.subr.bf16.mxu0 0
    %1251 = vmatpush2.bf16.msra.mxu0 0
    %1252 = vmatprep.subr.bf16.mxu0 0
    %1253 = vmatpush2.bf16.msra.mxu0 0
    %1254 = vmatprep.mubr.bf16.mxu0 0
    %1255 = vmatmul.mubr.bf16.gmra.mxu0 %v1220
    %v1256 = vpop.f32.mrf.mxu0
    %v1257 = vadd.f32 %v215, %v1256
    %v1258 = vpop.f32.mrf.mxu0
    %v1259 = vpop.f32.mrf.mxu0
    %v1260 = vpop.f32.mrf.mxu0
    %1261 = vdwg.mxu0
    %v1262 = vld [vmem:[%s0] sm:$0xff]
    %1264 = vrot.lane.b32.xlu0 %v1262, 64
    %v1265 = vpop.permute.xlu0 %1264
    %v1267 = vsub.f32 %v1257, %v1265
    %1269 = vrot.lane.b32.xlu0 %v1267, 64
    %v1270 = vpop.permute.xlu0 %1269
    %vm1272 = vcmask 654848
    %1273 = vst.msk [vmem:[#allocation9] sm:$0xff] %vm1272, %v1270
    %v1274 = vpack.c.bf16 %v1267, %v1267
    %v1276 = vsel %vm274, %v1274, 0
    %1278 = vmatprep.subr.bf16.mxu0 0
    %1279 = vmatpush1.bf16.msra.mxu0 0
    %1280 = vmatprep.subr.bf16.mxu0 0
    %1281 = vmatpush1.bf16.msra.mxu0 0
    %1282 = vmatprep.subr.bf16.mxu0 0
    %1283 = vmatpush1.bf16.msra.mxu0 0
    %1284 = vmatprep.subr.bf16.mxu0 0
    %1285 = vmatpush1.bf16.msra.mxu0 0
    %1286 = vmatprep.subr.bf16.mxu0 0
    %1287 = vmatpush1.bf16.msra.mxu0 0
    %1288 = vmatprep.subr.bf16.mxu0 0
    %1289 = vmatpush1.bf16.msra.mxu0 0
    %1290 = vmatprep.subr.bf16.mxu0 0
    %1291 = vmatpush1.bf16.msra.mxu0 0
    %1292 = vmatprep.subr.bf16.mxu0 0
    %1293 = vmatpush1.bf16.msra.mxu0 %v281
    %1294 = vmatprep.subr.bf16.mxu0 0
    %1295 = vmatpush2.bf16.msra.mxu0 0
    %1296 = vmatprep.subr.bf16.mxu0 0
    %1297 = vmatpush2.bf16.msra.mxu0 0
    %1298 = vmatprep.subr.bf16.mxu0 0
    %1299 = vmatpush2.bf16.msra.mxu0 0
    %1300 = vmatprep.subr.bf16.mxu0 0
    %1301 = vmatpush2.bf16.msra.mxu0 0
    %1302 = vmatprep.subr.bf16.mxu0 0
    %1303 = vmatpush2.bf16.msra.mxu0 0
    %1304 = vmatprep.subr.bf16.mxu0 0
    %1305 = vmatpush2.bf16.msra.mxu0 0
    %1306 = vmatprep.subr.bf16.mxu0 0
    %1307 = vmatpush2.bf16.msra.mxu0 0
    %1308 = vmatprep.subr.bf16.mxu0 0
    %1309 = vmatpush2.bf16.msra.mxu0 0
    %1310 = vmatprep.mubr.bf16.mxu0 0
    %1311 = vmatmul.mubr.bf16.gmra.mxu0 %v1276
    %v1312 = vpop.f32.mrf.mxu0
    %v1313 = vadd.f32 0.0, %v1312
    %v1314 = vpop.f32.mrf.mxu0
    %v1315 = vpop.f32.mrf.mxu0
    %v1316 = vpop.f32.mrf.mxu0
    %1317 = vdwg.mxu0
    %v1318 = vmul.f32 %v1217, %v1217
    %v1319 = vsub.f32 1.0, %v1318
    %v1320 = vmul.f32 %v1319, 0.1
    %v1321 = vmul.f32 %v1320, %v1313
    %v1322 = vsub.f32 %v1216, %v1321
    %v1323 = vpack.c.bf16 %v1321, %v1321
    %v1325 = vsel %vm155, %v1323, 0
    %1327 = vmatprep.subr.bf16.mxu0 0
    %1328 = vmatpush1.bf16.msra.mxu0 0
    %1329 = vmatprep.subr.bf16.mxu0 0
    %1330 = vmatpush1.bf16.msra.mxu0 0
    %1331 = vmatprep.subr.bf16.mxu0 0
    %1332 = vmatpush1.bf16.msra.mxu0 0
    %1333 = vmatprep.subr.bf16.mxu0 0
    %1334 = vmatpush1.bf16.msra.mxu0 0
    %1335 = vmatprep.subr.bf16.mxu0 0
    %1336 = vmatpush1.bf16.msra.mxu0 0
    %1337 = vmatprep.subr.bf16.mxu0 0
    %1338 = vmatpush1.bf16.msra.mxu0 0
    %1339 = vmatprep.subr.bf16.mxu0 0
    %1340 = vmatpush1.bf16.msra.mxu0 %v341
    %1341 = vmatprep.subr.bf16.mxu0 0
    %1342 = vmatpush1.bf16.msra.mxu0 %v340
    %1343 = vmatprep.subr.bf16.mxu0 0
    %1344 = vmatpush2.bf16.msra.mxu0 0
    %1345 = vmatprep.subr.bf16.mxu0 0
    %1346 = vmatpush2.bf16.msra.mxu0 0
    %1347 = vmatprep.subr.bf16.mxu0 0
    %1348 = vmatpush2.bf16.msra.mxu0 0
    %1349 = vmatprep.subr.bf16.mxu0 0
    %1350 = vmatpush2.bf16.msra.mxu0 0
    %1351 = vmatprep.subr.bf16.mxu0 0
    %1352 = vmatpush2.bf16.msra.mxu0 0
    %1353 = vmatprep.subr.bf16.mxu0 0
    %1354 = vmatpush2.bf16.msra.mxu0 0
    %1355 = vmatprep.subr.bf16.mxu0 0
    %1356 = vmatpush2.bf16.msra.mxu0 0
    %1357 = vmatprep.subr.bf16.mxu0 0
    %1358 = vmatpush2.bf16.msra.mxu0 0
    %1359 = vmatprep.mubr.bf16.mxu0 0
    %1360 = vmatmul.mubr.bf16.gmra.mxu0 %v1325
    %v1361 = vpop.f32.mrf.mxu0
    %v1362 = vadd.f32 0.0, %v1361
    %v1363 = vpop.f32.mrf.mxu0
    %v1364 = vpop.f32.mrf.mxu0
    %v1365 = vpop.f32.mrf.mxu0
    %1366 = vdwg.mxu0
    %v1367 = vmul.f32 %v1362, 0.1
    %v1368 = vsub.f32 %v1123, %v1367
    %v1369 = vtanh.pop %v1322
    %v1370 = vpack.c.bf16 %v1369, %v1369
    %v1371 = vpack.c.bf16 %v1368, %v1368
    %v1373 = vsel %vm95, %v1371, 0
    %1375 = vmatprep.subr.bf16.mxu0 0
    %1376 = vmatpush1.bf16.msra.mxu0 0
    %1377 = vmatprep.subr.bf16.mxu0 0
    %1378 = vmatpush1.bf16.msra.mxu0 0
    %1379 = vmatprep.subr.bf16.mxu0 0
    %1380 = vmatpush1.bf16.msra.mxu0 0
    %1381 = vmatprep.subr.bf16.mxu0 0
    %1382 = vmatpush1.bf16.msra.mxu0 0
    %1383 = vmatprep.subr.bf16.mxu0 0
    %1384 = vmatpush1.bf16.msra.mxu0 0
    %1385 = vmatprep.subr.bf16.mxu0 0
    %1386 = vmatpush1.bf16.msra.mxu0 0
    %1387 = vmatprep.subr.bf16.mxu0 0
    %1388 = vmatpush1.bf16.msra.mxu0 0
    %1389 = vmatprep.subr.bf16.mxu0 0
    %1390 = vmatpush1.bf16.msra.mxu0 %v101
    %1391 = vmatprep.subr.bf16.mxu0 0
    %1392 = vmatpush2.bf16.msra.mxu0 0
    %1393 = vmatprep.subr.bf16.mxu0 0
    %1394 = vmatpush2.bf16.msra.mxu0 0
    %1395 = vmatprep.subr.bf16.mxu0 0
    %1396 = vmatpush2.bf16.msra.mxu0 0
    %1397 = vmatprep.subr.bf16.mxu0 0
    %1398 = vmatpush2.bf16.msra.mxu0 0
    %1399 = vmatprep.subr.bf16.mxu0 0
    %1400 = vmatpush2.bf16.msra.mxu0 0
    %1401 = vmatprep.subr.bf16.mxu0 0
    %1402 = vmatpush2.bf16.msra.mxu0 0
    %1403 = vmatprep.subr.bf16.mxu0 0
    %1404 = vmatpush2.bf16.msra.mxu0 0
    %1405 = vmatprep.subr.bf16.mxu0 0
    %1406 = vmatpush2.bf16.msra.mxu0 0
    %1407 = vmatprep.mubr.bf16.mxu0 0
    %1408 = vmatmul.mubr.bf16.gmra.mxu0 %v1373
    %v1409 = vpop.f32.mrf.mxu0
    %v1410 = vadd.f32 0.0, %v1409
    %v1411 = vpop.f32.mrf.mxu0
    %v1412 = vpop.f32.mrf.mxu0
    %v1413 = vpop.f32.mrf.mxu0
    %1414 = vdwg.mxu0
    %v1416 = vsel %vm155, %v1370, 0
    %1418 = vmatprep.subr.bf16.mxu0 0
    %1419 = vmatpush1.bf16.msra.mxu0 0
    %1420 = vmatprep.subr.bf16.mxu0 0
    %1421 = vmatpush1.bf16.msra.mxu0 0
    %1422 = vmatprep.subr.bf16.mxu0 0
    %1423 = vmatpush1.bf16.msra.mxu0 0
    %1424 = vmatprep.subr.bf16.mxu0 0
    %1425 = vmatpush1.bf16.msra.mxu0 0
    %1426 = vmatprep.subr.bf16.mxu0 0
    %1427 = vmatpush1.bf16.msra.mxu0 0
    %1428 = vmatprep.subr.bf16.mxu0 0
    %1429 = vmatpush1.bf16.msra.mxu0 0
    %1430 = vmatprep.subr.bf16.mxu0 0
    %1431 = vmatpush1.bf16.msra.mxu0 %v152
    %1432 = vmatprep.subr.bf16.mxu0 0
    %1433 = vmatpush1.bf16.msra.mxu0 %v151
    %1434 = vmatprep.subr.bf16.mxu0 0
    %1435 = vmatpush2.bf16.msra.mxu0 0
    %1436 = vmatprep.subr.bf16.mxu0 0
    %1437 = vmatpush2.bf16.msra.mxu0 0
    %1438 = vmatprep.subr.bf16.mxu0 0
    %1439 = vmatpush2.bf16.msra.mxu0 0
    %1440 = vmatprep.subr.bf16.mxu0 0
    %1441 = vmatpush2.bf16.msra.mxu0 0
    %1442 = vmatprep.subr.bf16.mxu0 0
    %1443 = vmatpush2.bf16.msra.mxu0 0
    %1444 = vmatprep.subr.bf16.mxu0 0
    %1445 = vmatpush2.bf16.msra.mxu0 0
    %1446 = vmatprep.subr.bf16.mxu0 0
    %1447 = vmatpush2.bf16.msra.mxu0 0
    %1448 = vmatprep.subr.bf16.mxu0 0
    %1449 = vmatpush2.bf16.msra.mxu0 0
    %1450 = vmatprep.mubr.bf16.mxu0 0
    %1451 = vmatmul.mubr.bf16.gmra.mxu0 %v1416
    %v1452 = vpop.f32.mrf.mxu0
    %v1453 = vadd.f32 %v1410, %v1452
    %v1454 = vpop.f32.mrf.mxu0
    %v1455 = vpop.f32.mrf.mxu0
    %v1456 = vpop.f32.mrf.mxu0
    %1457 = vdwg.mxu0
    %v1458 = vmul.f32 %v1322, 0.5
    %v1459 = vadd.f32 %v1453, %v204
    %v1460 = vmul.f32 %v1459, 0.5
    %v1461 = vadd.f32 %v1458, %v1460
    %v1462 = vtanh.pop %v1461
    %v1463 = vpack.c.bf16 %v1462, %v1462
    %v1465 = vsel %vm155, %v1463, 0
    %1467 = vmatprep.subr.bf16.mxu0 0
    %1468 = vmatpush1.bf16.msra.mxu0 0
    %1469 = vmatprep.subr.bf16.mxu0 0
    %1470 = vmatpush1.bf16.msra.mxu0 0
    %1471 = vmatprep.subr.bf16.mxu0 0
    %1472 = vmatpush1.bf16.msra.mxu0 0
    %1473 = vmatprep.subr.bf16.mxu0 0
    %1474 = vmatpush1.bf16.msra.mxu0 0
    %1475 = vmatprep.subr.bf16.mxu0 0
    %1476 = vmatpush1.bf16.msra.mxu0 0
    %1477 = vmatprep.subr.bf16.mxu0 0
    %1478 = vmatpush1.bf16.msra.mxu0 0
    %1479 = vmatprep.subr.bf16.mxu0 0
    %1480 = vmatpush1.bf16.msra.mxu0 %v226
    %1481 = vmatprep.subr.bf16.mxu0 0
    %1482 = vmatpush1.bf16.msra.mxu0 %v225
    %1483 = vmatprep.subr.bf16.mxu0 0
    %1484 = vmatpush2.bf16.msra.mxu0 0
    %1485 = vmatprep.subr.bf16.mxu0 0
    %1486 = vmatpush2.bf16.msra.mxu0 0
    %1487 = vmatprep.subr.bf16.mxu0 0
    %1488 = vmatpush2.bf16.msra.mxu0 0
    %1489 = vmatprep.subr.bf16.mxu0 0
    %1490 = vmatpush2.bf16.msra.mxu0 0
    %1491 = vmatprep.subr.bf16.mxu0 0
    %1492 = vmatpush2.bf16.msra.mxu0 0
    %1493 = vmatprep.subr.bf16.mxu0 0
    %1494 = vmatpush2.bf16.msra.mxu0 0
    %1495 = vmatprep.subr.bf16.mxu0 0
    %1496 = vmatpush2.bf16.msra.mxu0 0
    %1497 = vmatprep.subr.bf16.mxu0 0
    %1498 = vmatpush2.bf16.msra.mxu0 0
    %1499 = vmatprep.mubr.bf16.mxu0 0
    %1500 = vmatmul.mubr.bf16.gmra.mxu0 %v1465
    %v1501 = vpop.f32.mrf.mxu0
    %v1502 = vadd.f32 %v215, %v1501
    %v1503 = vpop.f32.mrf.mxu0
    %v1504 = vpop.f32.mrf.mxu0
    %v1505 = vpop.f32.mrf.mxu0
    %1506 = vdwg.mxu0
    %v1507 = vld [vmem:[%s0] sm:$0xff]
    %1509 = vrot.lane.b32.xlu0 %v1507, 48
    %v1510 = vpop.permute.xlu0 %1509
    %v1512 = vsub.f32 %v1502, %v1510
    %1514 = vrot.lane.b32.xlu0 %v1512, 80
    %v1515 = vpop.permute.xlu0 %1514
    %vm1517 = vcmask 786048
    %1518 = vst.msk [vmem:[#allocation9] sm:$0xff] %vm1517, %v1515
    %v1519 = vpack.c.bf16 %v1512, %v1512
    %v1521 = vsel %vm274, %v1519, 0
    %1523 = vmatprep.subr.bf16.mxu0 0
    %1524 = vmatpush1.bf16.msra.mxu0 0
    %1525 = vmatprep.subr.bf16.mxu0 0
    %1526 = vmatpush1.bf16.msra.mxu0 0
    %1527 = vmatprep.subr.bf16.mxu0 0
    %1528 = vmatpush1.bf16.msra.mxu0 0
    %1529 = vmatprep.subr.bf16.mxu0 0
    %1530 = vmatpush1.bf16.msra.mxu0 0
    %1531 = vmatprep.subr.bf16.mxu0 0
    %1532 = vmatpush1.bf16.msra.mxu0 0
    %1533 = vmatprep.subr.bf16.mxu0 0
    %1534 = vmatpush1.bf16.msra.mxu0 0
    %1535 = vmatprep.subr.bf16.mxu0 0
    %1536 = vmatpush1.bf16.msra.mxu0 0
    %1537 = vmatprep.subr.bf16.mxu0 0
    %1538 = vmatpush1.bf16.msra.mxu0 %v281
    %1539 = vmatprep.subr.bf16.mxu0 0
    %1540 = vmatpush2.bf16.msra.mxu0 0
    %1541 = vmatprep.subr.bf16.mxu0 0
    %1542 = vmatpush2.bf16.msra.mxu0 0
    %1543 = vmatprep.subr.bf16.mxu0 0
    %1544 = vmatpush2.bf16.msra.mxu0 0
    %1545 = vmatprep.subr.bf16.mxu0 0
    %1546 = vmatpush2.bf16.msra.mxu0 0
    %1547 = vmatprep.subr.bf16.mxu0 0
    %1548 = vmatpush2.bf16.msra.mxu0 0
    %1549 = vmatprep.subr.bf16.mxu0 0
    %1550 = vmatpush2.bf16.msra.mxu0 0
    %1551 = vmatprep.subr.bf16.mxu0 0
    %1552 = vmatpush2.bf16.msra.mxu0 0
    %1553 = vmatprep.subr.bf16.mxu0 0
    %1554 = vmatpush2.bf16.msra.mxu0 0
    %1555 = vmatprep.mubr.bf16.mxu0 0
    %1556 = vmatmul.mubr.bf16.gmra.mxu0 %v1521
    %v1557 = vpop.f32.mrf.mxu0
    %v1558 = vadd.f32 0.0, %v1557
    %v1559 = vpop.f32.mrf.mxu0
    %v1560 = vpop.f32.mrf.mxu0
    %v1561 = vpop.f32.mrf.mxu0
    %1562 = vdwg.mxu0
    %v1563 = vmul.f32 %v1462, %v1462
    %v1564 = vsub.f32 1.0, %v1563
    %v1565 = vmul.f32 %v1564, 0.1
    %v1566 = vmul.f32 %v1565, %v1558
    %v1567 = vsub.f32 %v1461, %v1566
    %v1568 = vpack.c.bf16 %v1566, %v1566
    %v1570 = vsel %vm155, %v1568, 0
    %1572 = vmatprep.subr.bf16.mxu0 0
    %1573 = vmatpush1.bf16.msra.mxu0 0
    %1574 = vmatprep.subr.bf16.mxu0 0
    %1575 = vmatpush1.bf16.msra.mxu0 0
    %1576 = vmatprep.subr.bf16.mxu0 0
    %1577 = vmatpush1.bf16.msra.mxu0 0
    %1578 = vmatprep.subr.bf16.mxu0 0
    %1579 = vmatpush1.bf16.msra.mxu0 0
    %1580 = vmatprep.subr.bf16.mxu0 0
    %1581 = vmatpush1.bf16.msra.mxu0 0
    %1582 = vmatprep.subr.bf16.mxu0 0
    %1583 = vmatpush1.bf16.msra.mxu0 0
    %1584 = vmatprep.subr.bf16.mxu0 0
    %1585 = vmatpush1.bf16.msra.mxu0 %v341
    %1586 = vmatprep.subr.bf16.mxu0 0
    %1587 = vmatpush1.bf16.msra.mxu0 %v340
    %1588 = vmatprep.subr.bf16.mxu0 0
    %1589 = vmatpush2.bf16.msra.mxu0 0
    %1590 = vmatprep.subr.bf16.mxu0 0
    %1591 = vmatpush2.bf16.msra.mxu0 0
    %1592 = vmatprep.subr.bf16.mxu0 0
    %1593 = vmatpush2.bf16.msra.mxu0 0
    %1594 = vmatprep.subr.bf16.mxu0 0
    %1595 = vmatpush2.bf16.msra.mxu0 0
    %1596 = vmatprep.subr.bf16.mxu0 0
    %1597 = vmatpush2.bf16.msra.mxu0 0
    %1598 = vmatprep.subr.bf16.mxu0 0
    %1599 = vmatpush2.bf16.msra.mxu0 0
    %1600 = vmatprep.subr.bf16.mxu0 0
    %1601 = vmatpush2.bf16.msra.mxu0 0
    %1602 = vmatprep.subr.bf16.mxu0 0
    %1603 = vmatpush2.bf16.msra.mxu0 0
    %1604 = vmatprep.mubr.bf16.mxu0 0
    %1605 = vmatmul.mubr.bf16.gmra.mxu0 %v1570
    %v1606 = vpop.f32.mrf.mxu0
    %v1607 = vadd.f32 0.0, %v1606
    %v1608 = vpop.f32.mrf.mxu0
    %v1609 = vpop.f32.mrf.mxu0
    %v1610 = vpop.f32.mrf.mxu0
    %1611 = vdwg.mxu0
    %v1612 = vmul.f32 %v1607, 0.1
    %v1613 = vsub.f32 %v1368, %v1612
    %v1614 = vtanh.pop %v1567
    %v1615 = vpack.c.bf16 %v1614, %v1614
    %v1616 = vpack.c.bf16 %v1613, %v1613
    %v1618 = vsel %vm95, %v1616, 0
    %1620 = vmatprep.subr.bf16.mxu0 0
    %1621 = vmatpush1.bf16.msra.mxu0 0
    %1622 = vmatprep.subr.bf16.mxu0 0
    %1623 = vmatpush1.bf16.msra.mxu0 0
    %1624 = vmatprep.subr.bf16.mxu0 0
    %1625 = vmatpush1.bf16.msra.mxu0 0
    %1626 = vmatprep.subr.bf16.mxu0 0
    %1627 = vmatpush1.bf16.msra.mxu0 0
    %1628 = vmatprep.subr.bf16.mxu0 0
    %1629 = vmatpush1.bf16.msra.mxu0 0
    %1630 = vmatprep.subr.bf16.mxu0 0
    %1631 = vmatpush1.bf16.msra.mxu0 0
    %1632 = vmatprep.subr.bf16.mxu0 0
    %1633 = vmatpush1.bf16.msra.mxu0 0
    %1634 = vmatprep.subr.bf16.mxu0 0
    %1635 = vmatpush1.bf16.msra.mxu0 %v101
    %1636 = vmatprep.subr.bf16.mxu0 0
    %1637 = vmatpush2.bf16.msra.mxu0 0
    %1638 = vmatprep.subr.bf16.mxu0 0
    %1639 = vmatpush2.bf16.msra.mxu0 0
    %1640 = vmatprep.subr.bf16.mxu0 0
    %1641 = vmatpush2.bf16.msra.mxu0 0
    %1642 = vmatprep.subr.bf16.mxu0 0
    %1643 = vmatpush2.bf16.msra.mxu0 0
    %1644 = vmatprep.subr.bf16.mxu0 0
    %1645 = vmatpush2.bf16.msra.mxu0 0
    %1646 = vmatprep.subr.bf16.mxu0 0
    %1647 = vmatpush2.bf16.msra.mxu0 0
    %1648 = vmatprep.subr.bf16.mxu0 0
    %1649 = vmatpush2.bf16.msra.mxu0 0
    %1650 = vmatprep.subr.bf16.mxu0 0
    %1651 = vmatpush2.bf16.msra.mxu0 0
    %1652 = vmatprep.mubr.bf16.mxu0 0
    %1653 = vmatmul.mubr.bf16.gmra.mxu0 %v1618
    %v1654 = vpop.f32.mrf.mxu0
    %v1655 = vadd.f32 0.0, %v1654
    %v1656 = vpop.f32.mrf.mxu0
    %v1657 = vpop.f32.mrf.mxu0
    %v1658 = vpop.f32.mrf.mxu0
    %1659 = vdwg.mxu0
    %v1661 = vsel %vm155, %v1615, 0
    %1663 = vmatprep.subr.bf16.mxu0 0
    %1664 = vmatpush1.bf16.msra.mxu0 0
    %1665 = vmatprep.subr.bf16.mxu0 0
    %1666 = vmatpush1.bf16.msra.mxu0 0
    %1667 = vmatprep.subr.bf16.mxu0 0
    %1668 = vmatpush1.bf16.msra.mxu0 0
    %1669 = vmatprep.subr.bf16.mxu0 0
    %1670 = vmatpush1.bf16.msra.mxu0 0
    %1671 = vmatprep.subr.bf16.mxu0 0
    %1672 = vmatpush1.bf16.msra.mxu0 0
    %1673 = vmatprep.subr.bf16.mxu0 0
    %1674 = vmatpush1.bf16.msra.mxu0 0
    %1675 = vmatprep.subr.bf16.mxu0 0
    %1676 = vmatpush1.bf16.msra.mxu0 %v152
    %1677 = vmatprep.subr.bf16.mxu0 0
    %1678 = vmatpush1.bf16.msra.mxu0 %v151
    %1679 = vmatprep.subr.bf16.mxu0 0
    %1680 = vmatpush2.bf16.msra.mxu0 0
    %1681 = vmatprep.subr.bf16.mxu0 0
    %1682 = vmatpush2.bf16.msra.mxu0 0
    %1683 = vmatprep.subr.bf16.mxu0 0
    %1684 = vmatpush2.bf16.msra.mxu0 0
    %1685 = vmatprep.subr.bf16.mxu0 0
    %1686 = vmatpush2.bf16.msra.mxu0 0
    %1687 = vmatprep.subr.bf16.mxu0 0
    %1688 = vmatpush2.bf16.msra.mxu0 0
    %1689 = vmatprep.subr.bf16.mxu0 0
    %1690 = vmatpush2.bf16.msra.mxu0 0
    %1691 = vmatprep.subr.bf16.mxu0 0
    %1692 = vmatpush2.bf16.msra.mxu0 0
    %1693 = vmatprep.subr.bf16.mxu0 0
    %1694 = vmatpush2.bf16.msra.mxu0 0
    %1695 = vmatprep.mubr.bf16.mxu0 0
    %1696 = vmatmul.mubr.bf16.gmra.mxu0 %v1661
    %v1697 = vpop.f32.mrf.mxu0
    %v1698 = vadd.f32 %v1655, %v1697
    %v1699 = vpop.f32.mrf.mxu0
    %v1700 = vpop.f32.mrf.mxu0
    %v1701 = vpop.f32.mrf.mxu0
    %1702 = vdwg.mxu0
    %v1703 = vmul.f32 %v1567, 0.5
    %v1704 = vadd.f32 %v1698, %v204
    %v1705 = vmul.f32 %v1704, 0.5
    %v1706 = vadd.f32 %v1703, %v1705
    %v1707 = vtanh.pop %v1706
    %v1708 = vpack.c.bf16 %v1707, %v1707
    %v1710 = vsel %vm155, %v1708, 0
    %1712 = vmatprep.subr.bf16.mxu0 0
    %1713 = vmatpush1.bf16.msra.mxu0 0
    %1714 = vmatprep.subr.bf16.mxu0 0
    %1715 = vmatpush1.bf16.msra.mxu0 0
    %1716 = vmatprep.subr.bf16.mxu0 0
    %1717 = vmatpush1.bf16.msra.mxu0 0
    %1718 = vmatprep.subr.bf16.mxu0 0
    %1719 = vmatpush1.bf16.msra.mxu0 0
    %1720 = vmatprep.subr.bf16.mxu0 0
    %1721 = vmatpush1.bf16.msra.mxu0 0
    %1722 = vmatprep.subr.bf16.mxu0 0
    %1723 = vmatpush1.bf16.msra.mxu0 0
    %1724 = vmatprep.subr.bf16.mxu0 0
    %1725 = vmatpush1.bf16.msra.mxu0 %v226
    %1726 = vmatprep.subr.bf16.mxu0 0
    %1727 = vmatpush1.bf16.msra.mxu0 %v225
    %1728 = vmatprep.subr.bf16.mxu0 0
    %1729 = vmatpush2.bf16.msra.mxu0 0
    %1730 = vmatprep.subr.bf16.mxu0 0
    %1731 = vmatpush2.bf16.msra.mxu0 0
    %1732 = vmatprep.subr.bf16.mxu0 0
    %1733 = vmatpush2.bf16.msra.mxu0 0
    %1734 = vmatprep.subr.bf16.mxu0 0
    %1735 = vmatpush2.bf16.msra.mxu0 0
    %1736 = vmatprep.subr.bf16.mxu0 0
    %1737 = vmatpush2.bf16.msra.mxu0 0
    %1738 = vmatprep.subr.bf16.mxu0 0
    %1739 = vmatpush2.bf16.msra.mxu0 0
    %1740 = vmatprep.subr.bf16.mxu0 0
    %1741 = vmatpush2.bf16.msra.mxu0 0
    %1742 = vmatprep.subr.bf16.mxu0 0
    %1743 = vmatpush2.bf16.msra.mxu0 0
    %1744 = vmatprep.mubr.bf16.mxu0 0
    %1745 = vmatmul.mubr.bf16.gmra.mxu0 %v1710
    %v1746 = vpop.f32.mrf.mxu0
    %v1747 = vadd.f32 %v215, %v1746
    %v1748 = vpop.f32.mrf.mxu0
    %v1749 = vpop.f32.mrf.mxu0
    %v1750 = vpop.f32.mrf.mxu0
    %1751 = vdwg.mxu0
    %v1752 = vld [vmem:[%s0] sm:$0xff]
    %1754 = vrot.lane.b32.xlu0 %v1752, 32
    %v1755 = vpop.permute.xlu0 %1754
    %v1757 = vsub.f32 %v1747, %v1755
    %1759 = vrot.lane.b32.xlu0 %v1757, 96
    %v1760 = vpop.permute.xlu0 %1759
    %vm1762 = vcmask 917248
    %1763 = vst.msk [vmem:[#allocation9] sm:$0xff] %vm1762, %v1760
    %v1764 = vpack.c.bf16 %v1757, %v1757
    %v1766 = vsel %vm274, %v1764, 0
    %1768 = vmatprep.subr.bf16.mxu0 0
    %1769 = vmatpush1.bf16.msra.mxu0 0
    %1770 = vmatprep.subr.bf16.mxu0 0
    %1771 = vmatpush1.bf16.msra.mxu0 0
    %1772 = vmatprep.subr.bf16.mxu0 0
    %1773 = vmatpush1.bf16.msra.mxu0 0
    %1774 = vmatprep.subr.bf16.mxu0 0
    %1775 = vmatpush1.bf16.msra.mxu0 0
    %1776 = vmatprep.subr.bf16.mxu0 0
    %1777 = vmatpush1.bf16.msra.mxu0 0
    %1778 = vmatprep.subr.bf16.mxu0 0
    %1779 = vmatpush1.bf16.msra.mxu0 0
    %1780 = vmatprep.subr.bf16.mxu0 0
    %1781 = vmatpush1.bf16.msra.mxu0 0
    %1782 = vmatprep.subr.bf16.mxu0 0
    %1783 = vmatpush1.bf16.msra.mxu0 %v281
    %1784 = vmatprep.subr.bf16.mxu0 0
    %1785 = vmatpush2.bf16.msra.mxu0 0
    %1786 = vmatprep.subr.bf16.mxu0 0
    %1787 = vmatpush2.bf16.msra.mxu0 0
    %1788 = vmatprep.subr.bf16.mxu0 0
    %1789 = vmatpush2.bf16.msra.mxu0 0
    %1790 = vmatprep.subr.bf16.mxu0 0
    %1791 = vmatpush2.bf16.msra.mxu0 0
    %1792 = vmatprep.subr.bf16.mxu0 0
    %1793 = vmatpush2.bf16.msra.mxu0 0
    %1794 = vmatprep.subr.bf16.mxu0 0
    %1795 = vmatpush2.bf16.msra.mxu0 0
    %1796 = vmatprep.subr.bf16.mxu0 0
    %1797 = vmatpush2.bf16.msra.mxu0 0
    %1798 = vmatprep.subr.bf16.mxu0 0
    %1799 = vmatpush2.bf16.msra.mxu0 0
    %1800 = vmatprep.mubr.bf16.mxu0 0
    %1801 = vmatmul.mubr.bf16.gmra.mxu0 %v1766
    %v1802 = vpop.f32.mrf.mxu0
    %v1803 = vadd.f32 0.0, %v1802
    %v1804 = vpop.f32.mrf.mxu0
    %v1805 = vpop.f32.mrf.mxu0
    %v1806 = vpop.f32.mrf.mxu0
    %1807 = vdwg.mxu0
    %v1808 = vmul.f32 %v1707, %v1707
    %v1809 = vsub.f32 1.0, %v1808
    %v1810 = vmul.f32 %v1809, 0.1
    %v1811 = vmul.f32 %v1810, %v1803
    %v1812 = vsub.f32 %v1706, %v1811
    %v1813 = vpack.c.bf16 %v1811, %v1811
    %v1815 = vsel %vm155, %v1813, 0
    %1817 = vmatprep.subr.bf16.mxu0 0
    %1818 = vmatpush1.bf16.msra.mxu0 0
    %1819 = vmatprep.subr.bf16.mxu0 0
    %1820 = vmatpush1.bf16.msra.mxu0 0
    %1821 = vmatprep.subr.bf16.mxu0 0
    %1822 = vmatpush1.bf16.msra.mxu0 0
    %1823 = vmatprep.subr.bf16.mxu0 0
    %1824 = vmatpush1.bf16.msra.mxu0 0
    %1825 = vmatprep.subr.bf16.mxu0 0
    %1826 = vmatpush1.bf16.msra.mxu0 0
    %1827 = vmatprep.subr.bf16.mxu0 0
    %1828 = vmatpush1.bf16.msra.mxu0 0
    %1829 = vmatprep.subr.bf16.mxu0 0
    %1830 = vmatpush1.bf16.msra.mxu0 %v341
    %1831 = vmatprep.subr.bf16.mxu0 0
    %1832 = vmatpush1.bf16.msra.mxu0 %v340
    %1833 = vmatprep.subr.bf16.mxu0 0
    %1834 = vmatpush2.bf16.msra.mxu0 0
    %1835 = vmatprep.subr.bf16.mxu0 0
    %1836 = vmatpush2.bf16.msra.mxu0 0
    %1837 = vmatprep.subr.bf16.mxu0 0
    %1838 = vmatpush2.bf16.msra.mxu0 0
    %1839 = vmatprep.subr.bf16.mxu0 0
    %1840 = vmatpush2.bf16.msra.mxu0 0
    %1841 = vmatprep.subr.bf16.mxu0 0
    %1842 = vmatpush2.bf16.msra.mxu0 0
    %1843 = vmatprep.subr.bf16.mxu0 0
    %1844 = vmatpush2.bf16.msra.mxu0 0
    %1845 = vmatprep.subr.bf16.mxu0 0
    %1846 = vmatpush2.bf16.msra.mxu0 0
    %1847 = vmatprep.subr.bf16.mxu0 0
    %1848 = vmatpush2.bf16.msra.mxu0 0
    %1849 = vmatprep.mubr.bf16.mxu0 0
    %1850 = vmatmul.mubr.bf16.gmra.mxu0 %v1815
    %v1851 = vpop.f32.mrf.mxu0
    %v1852 = vadd.f32 0.0, %v1851
    %v1853 = vpop.f32.mrf.mxu0
    %v1854 = vpop.f32.mrf.mxu0
    %v1855 = vpop.f32.mrf.mxu0
    %1856 = vdwg.mxu0
    %v1857 = vmul.f32 %v1852, 0.1
    %v1858 = vsub.f32 %v1613, %v1857
    %v1859 = vtanh.pop %v1812
    %v1860 = vpack.c.bf16 %v1859, %v1859
    %v1861 = vpack.c.bf16 %v1858, %v1858
    %v1863 = vsel %vm95, %v1861, 0
    %1865 = vmatprep.subr.bf16.mxu0 0
    %1866 = vmatpush1.bf16.msra.mxu0 0
    %1867 = vmatprep.subr.bf16.mxu0 0
    %1868 = vmatpush1.bf16.msra.mxu0 0
    %1869 = vmatprep.subr.bf16.mxu0 0
    %1870 = vmatpush1.bf16.msra.mxu0 0
    %1871 = vmatprep.subr.bf16.mxu0 0
    %1872 = vmatpush1.bf16.msra.mxu0 0
    %1873 = vmatprep.subr.bf16.mxu0 0
    %1874 = vmatpush1.bf16.msra.mxu0 0
    %1875 = vmatprep.subr.bf16.mxu0 0
    %1876 = vmatpush1.bf16.msra.mxu0 0
    %1877 = vmatprep.subr.bf16.mxu0 0
    %1878 = vmatpush1.bf16.msra.mxu0 0
    %1879 = vmatprep.subr.bf16.mxu0 0
    %1880 = vmatpush1.bf16.msra.mxu0 %v101
    %1881 = vmatprep.subr.bf16.mxu0 0
    %1882 = vmatpush2.bf16.msra.mxu0 0
    %1883 = vmatprep.subr.bf16.mxu0 0
    %1884 = vmatpush2.bf16.msra.mxu0 0
    %1885 = vmatprep.subr.bf16.mxu0 0
    %1886 = vmatpush2.bf16.msra.mxu0 0
    %1887 = vmatprep.subr.bf16.mxu0 0
    %1888 = vmatpush2.bf16.msra.mxu0 0
    %1889 = vmatprep.subr.bf16.mxu0 0
    %1890 = vmatpush2.bf16.msra.mxu0 0
    %1891 = vmatprep.subr.bf16.mxu0 0
    %1892 = vmatpush2.bf16.msra.mxu0 0
    %1893 = vmatprep.subr.bf16.mxu0 0
    %1894 = vmatpush2.bf16.msra.mxu0 0
    %1895 = vmatprep.subr.bf16.mxu0 0
    %1896 = vmatpush2.bf16.msra.mxu0 0
    %1897 = vmatprep.mubr.bf16.mxu0 0
    %1898 = vmatmul.mubr.bf16.gmra.mxu0 %v1863
    %v1899 = vpop.f32.mrf.mxu0
    %v1900 = vadd.f32 0.0, %v1899
    %v1901 = vpop.f32.mrf.mxu0
    %v1902 = vpop.f32.mrf.mxu0
    %v1903 = vpop.f32.mrf.mxu0
    %1904 = vdwg.mxu0
    %v1906 = vsel %vm155, %v1860, 0
    %1908 = vmatprep.subr.bf16.mxu0 0
    %1909 = vmatpush1.bf16.msra.mxu0 0
    %1910 = vmatprep.subr.bf16.mxu0 0
    %1911 = vmatpush1.bf16.msra.mxu0 0
    %1912 = vmatprep.subr.bf16.mxu0 0
    %1913 = vmatpush1.bf16.msra.mxu0 0
    %1914 = vmatprep.subr.bf16.mxu0 0
    %1915 = vmatpush1.bf16.msra.mxu0 0
    %1916 = vmatprep.subr.bf16.mxu0 0
    %1917 = vmatpush1.bf16.msra.mxu0 0
    %1918 = vmatprep.subr.bf16.mxu0 0
    %1919 = vmatpush1.bf16.msra.mxu0 0
    %1920 = vmatprep.subr.bf16.mxu0 0
    %1921 = vmatpush1.bf16.msra.mxu0 %v152
    %1922 = vmatprep.subr.bf16.mxu0 0
    %1923 = vmatpush1.bf16.msra.mxu0 %v151
    %1924 = vmatprep.subr.bf16.mxu0 0
    %1925 = vmatpush2.bf16.msra.mxu0 0
    %1926 = vmatprep.subr.bf16.mxu0 0
    %1927 = vmatpush2.bf16.msra.mxu0 0
    %1928 = vmatprep.subr.bf16.mxu0 0
    %1929 = vmatpush2.bf16.msra.mxu0 0
    %1930 = vmatprep.subr.bf16.mxu0 0
    %1931 = vmatpush2.bf16.msra.mxu0 0
    %1932 = vmatprep.subr.bf16.mxu0 0
    %1933 = vmatpush2.bf16.msra.mxu0 0
    %1934 = vmatprep.subr.bf16.mxu0 0
    %1935 = vmatpush2.bf16.msra.mxu0 0
    %1936 = vmatprep.subr.bf16.mxu0 0
    %1937 = vmatpush2.bf16.msra.mxu0 0
    %1938 = vmatprep.subr.bf16.mxu0 0
    %1939 = vmatpush2.bf16.msra.mxu0 0
    %1940 = vmatprep.mubr.bf16.mxu0 0
    %1941 = vmatmul.mubr.bf16.gmra.mxu0 %v1906
    %v1942 = vpop.f32.mrf.mxu0
    %v1943 = vadd.f32 %v1900, %v1942
    %v1944 = vpop.f32.mrf.mxu0
    %v1945 = vpop.f32.mrf.mxu0
    %v1946 = vpop.f32.mrf.mxu0
    %1947 = vdwg.mxu0
    %v1948 = vmul.f32 %v1812, 0.5
    %v1949 = vadd.f32 %v1943, %v204
    %v1950 = vmul.f32 %v1949, 0.5
    %v1951 = vadd.f32 %v1948, %v1950
    %v1952 = vtanh.pop %v1951
    %v1953 = vpack.c.bf16 %v1952, %v1952
    %v1955 = vsel %vm155, %v1953, 0
    %1957 = vmatprep.subr.bf16.mxu0 0
    %1958 = vmatpush1.bf16.msra.mxu0 0
    %1959 = vmatprep.subr.bf16.mxu0 0
    %1960 = vmatpush1.bf16.msra.mxu0 0
    %1961 = vmatprep.subr.bf16.mxu0 0
    %1962 = vmatpush1.bf16.msra.mxu0 0
    %1963 = vmatprep.subr.bf16.mxu0 0
    %1964 = vmatpush1.bf16.msra.mxu0 0
    %1965 = vmatprep.subr.bf16.mxu0 0
    %1966 = vmatpush1.bf16.msra.mxu0 0
    %1967 = vmatprep.subr.bf16.mxu0 0
    %1968 = vmatpush1.bf16.msra.mxu0 0
    %1969 = vmatprep.subr.bf16.mxu0 0
    %1970 = vmatpush1.bf16.msra.mxu0 %v226
    %1971 = vmatprep.subr.bf16.mxu0 0
    %1972 = vmatpush1.bf16.msra.mxu0 %v225
    %1973 = vmatprep.subr.bf16.mxu0 0
    %1974 = vmatpush2.bf16.msra.mxu0 0
    %1975 = vmatprep.subr.bf16.mxu0 0
    %1976 = vmatpush2.bf16.msra.mxu0 0
    %1977 = vmatprep.subr.bf16.mxu0 0
    %1978 = vmatpush2.bf16.msra.mxu0 0
    %1979 = vmatprep.subr.bf16.mxu0 0
    %1980 = vmatpush2.bf16.msra.mxu0 0
    %1981 = vmatprep.subr.bf16.mxu0 0
    %1982 = vmatpush2.bf16.msra.mxu0 0
    %1983 = vmatprep.subr.bf16.mxu0 0
    %1984 = vmatpush2.bf16.msra.mxu0 0
    %1985 = vmatprep.subr.bf16.mxu0 0
    %1986 = vmatpush2.bf16.msra.mxu0 0
    %1987 = vmatprep.subr.bf16.mxu0 0
    %1988 = vmatpush2.bf16.msra.mxu0 0
    %1989 = vmatprep.mubr.bf16.mxu0 0
    %1990 = vmatmul.mubr.bf16.gmra.mxu0 %v1955
    %v1991 = vpop.f32.mrf.mxu0
    %v1992 = vadd.f32 %v215, %v1991
    %v1993 = vpop.f32.mrf.mxu0
    %v1994 = vpop.f32.mrf.mxu0
    %v1995 = vpop.f32.mrf.mxu0
    %1996 = vdwg.mxu0
    %v1997 = vld [vmem:[%s0] sm:$0xff]
    %1999 = vrot.lane.b32.xlu0 %v1997, 16
    %v2000 = vpop.permute.xlu0 %1999
    %v2002 = vsub.f32 %v1992, %v2000
    %2004 = vrot.lane.b32.xlu0 %v2002, 112
    %v2005 = vpop.permute.xlu0 %2004
    %vm2007 = vcmask 1048448
    %2008 = vst.msk [vmem:[#allocation9] sm:$0xff] %vm2007, %v2005
    %v2009 = vpack.c.bf16 %v2002, %v2002
    %v2011 = vsel %vm274, %v2009, 0
    %2013 = vmatprep.subr.bf16.mxu0 0
    %2014 = vmatpush1.bf16.msra.mxu0 0
    %2015 = vmatprep.subr.bf16.mxu0 0
    %2016 = vmatpush1.bf16.msra.mxu0 0
    %2017 = vmatprep.subr.bf16.mxu0 0
    %2018 = vmatpush1.bf16.msra.mxu0 0
    %2019 = vmatprep.subr.bf16.mxu0 0
    %2020 = vmatpush1.bf16.msra.mxu0 0
    %2021 = vmatprep.subr.bf16.mxu0 0
    %2022 = vmatpush1.bf16.msra.mxu0 0
    %2023 = vmatprep.subr.bf16.mxu0 0
    %2024 = vmatpush1.bf16.msra.mxu0 0
    %2025 = vmatprep.subr.bf16.mxu0 0
    %2026 = vmatpush1.bf16.msra.mxu0 0
    %2027 = vmatprep.subr.bf16.mxu0 0
    %2028 = vmatpush1.bf16.msra.mxu0 %v281
    %2029 = vmatprep.subr.bf16.mxu0 0
    %2030 = vmatpush2.bf16.msra.mxu0 0
    %2031 = vmatprep.subr.bf16.mxu0 0
    %2032 = vmatpush2.bf16.msra.mxu0 0
    %2033 = vmatprep.subr.bf16.mxu0 0
    %2034 = vmatpush2.bf16.msra.mxu0 0
    %2035 = vmatprep.subr.bf16.mxu0 0
    %2036 = vmatpush2.bf16.msra.mxu0 0
    %2037 = vmatprep.subr.bf16.mxu0 0
    %2038 = vmatpush2.bf16.msra.mxu0 0
    %2039 = vmatprep.subr.bf16.mxu0 0
    %2040 = vmatpush2.bf16.msra.mxu0 0
    %2041 = vmatprep.subr.bf16.mxu0 0
    %2042 = vmatpush2.bf16.msra.mxu0 0
    %2043 = vmatprep.subr.bf16.mxu0 0
    %2044 = vmatpush2.bf16.msra.mxu0 0
    %2045 = vmatprep.mubr.bf16.mxu0 0
    %2046 = vmatmul.mubr.bf16.gmra.mxu0 %v2011
    %v2047 = vpop.f32.mrf.mxu0
    %v2048 = vadd.f32 0.0, %v2047
    %v2049 = vpop.f32.mrf.mxu0
    %v2050 = vpop.f32.mrf.mxu0
    %v2051 = vpop.f32.mrf.mxu0
    %2052 = vdwg.mxu0
    %v2053 = vmul.f32 %v1952, %v1952
    %v2054 = vsub.f32 1.0, %v2053
    %v2055 = vmul.f32 %v2054, 0.1
    %v2056 = vmul.f32 %v2055, %v2048
    %v2057 = vsub.f32 %v1951, %v2056
    %v2058 = vpack.c.bf16 %v2056, %v2056
    %v2060 = vsel %vm155, %v2058, 0
    %2062 = vmatprep.subr.bf16.mxu0 0
    %2063 = vmatpush1.bf16.msra.mxu0 0
    %2064 = vmatprep.subr.bf16.mxu0 0
    %2065 = vmatpush1.bf16.msra.mxu0 0
    %2066 = vmatprep.subr.bf16.mxu0 0
    %2067 = vmatpush1.bf16.msra.mxu0 0
    %2068 = vmatprep.subr.bf16.mxu0 0
    %2069 = vmatpush1.bf16.msra.mxu0 0
    %2070 = vmatprep.subr.bf16.mxu0 0
    %2071 = vmatpush1.bf16.msra.mxu0 0
    %2072 = vmatprep.subr.bf16.mxu0 0
    %2073 = vmatpush1.bf16.msra.mxu0 0
    %2074 = vmatprep.subr.bf16.mxu0 0
    %2075 = vmatpush1.bf16.msra.mxu0 %v341
    %2076 = vmatprep.subr.bf16.mxu0 0
    %2077 = vmatpush1.bf16.msra.mxu0 %v340
    %2078 = vmatprep.subr.bf16.mxu0 0
    %2079 = vmatpush2.bf16.msra.mxu0 0
    %2080 = vmatprep.subr.bf16.mxu0 0
    %2081 = vmatpush2.bf16.msra.mxu0 0
    %2082 = vmatprep.subr.bf16.mxu0 0
    %2083 = vmatpush2.bf16.msra.mxu0 0
    %2084 = vmatprep.subr.bf16.mxu0 0
    %2085 = vmatpush2.bf16.msra.mxu0 0
    %2086 = vmatprep.subr.bf16.mxu0 0
    %2087 = vmatpush2.bf16.msra.mxu0 0
    %2088 = vmatprep.subr.bf16.mxu0 0
    %2089 = vmatpush2.bf16.msra.mxu0 0
    %2090 = vmatprep.subr.bf16.mxu0 0
    %2091 = vmatpush2.bf16.msra.mxu0 0
    %2092 = vmatprep.subr.bf16.mxu0 0
    %2093 = vmatpush2.bf16.msra.mxu0 0
    %2094 = vmatprep.mubr.bf16.mxu0 0
    %2095 = vmatmul.mubr.bf16.gmra.mxu0 %v2060
    %v2096 = vpop.f32.mrf.mxu0
    %v2097 = vadd.f32 0.0, %v2096
    %v2098 = vpop.f32.mrf.mxu0
    %v2099 = vpop.f32.mrf.mxu0
    %v2100 = vpop.f32.mrf.mxu0
    %2101 = vdwg.mxu0
    %v2102 = vmul.f32 %v2097, 0.1
    %v2103 = vsub.f32 %v1858, %v2102
    %2104 = vst.msk [vmem:[#allocation2] sm:$0xff] %vm155, %v2057
    %2105 = vst.msk [vmem:[#allocation3] sm:$0xff] %vm95, %v2103
    // Predicated region
    $region54: #{tpu_custom_call.1} parent=1 // pred_check
      _
    $region55: #{tpu_custom_call.1} parent=1 // pred_check_branch
      %2107 = sbr.rel (0) target = $region57
    $region56: #{tpu_custom_call.1} parent=1 // pred_region
      %s2109 = ssub.s32 128, 128
      %2110 = vsyncadd [#allocation6], %s2109
      %s2112 = sshll.u32 [#allocation9], 4
      %s2113 = int_to_ptr.vmem [resolvable:$true] %s2112
      %2115 = dma.vmem_to_hbm [thread:$0]  %s2113, 128, %s10, [#allocation6]
    $region57: #{tpu_custom_call.1} parent=1 // pred_fallthru
      _
    // Predicated region
    $region58: #{tpu_custom_call.1} parent=1 // pred_check
      _
    $region59: #{tpu_custom_call.1} parent=1 // pred_check_branch
      %2117 = sbr.rel (0) target = $region61
    $region60: #{tpu_custom_call.1} parent=1 // pred_region
      %2118 = dma.done [#allocation6], 128
    $region61: #{tpu_custom_call.1} parent=1 // pred_fallthru
      _
    %2119 = vsyncpa [#allocation5], 1
    %2120 = vsyncpa [#allocation8], 1
    %2121 = vsyncpa [#allocation6], 1

</llo_original>
